<compile_context>
chip_gen: v6e
topology: v6e:2x2x1
jax: 0.10.0
libtpu: 0.0.40
codegen_flags: <defaults>
</compile_context>

<pallas_src>
import numpy as np
import jax
import jax.numpy as jnp
from jax.experimental import pallas as pl
from jax.experimental.pallas import tpu as pltpu


# ----------------------------- Pallas kernel ------------------------------ #
def make_kernel(H, W, B):
    HW = H * W

    def row_shift(act, s):
        # out[r, :] = act[r + s, :], zero-filled outside [0, M).  Static
        # sublane slice + zero concat; any in-range-but-wrong-neighbor rows
        # (W-boundary wrap, batch crossing) are killed by the validity mask.
        if s == 0:
            return act
        M, L = act.shape
        pad = jnp.zeros((abs(s), L), act.dtype)
        if s > 0:
            return jnp.concatenate([act[s:, :], pad], axis=0)
        return jnp.concatenate([pad, act[:M + s, :]], axis=0)

    def conv3x3_relu(act, w_ref, b_ref, mask):
        # act:   (M_pad, Cin) f32, row r = (h*W + w)*B + b   (hw-major rows)
        # w_ref: (9*Cin, Cout) dense weight, row = (kh*3+kw)*Cin + cin
        # b_ref: (1, Cout)
        # mask:  (M_pad, 9) 0/1 zero-padding validity per (row, tap)
        taps = []
        for kh in range(3):
            for kw in range(3):
                k = kh * 3 + kw
                s = ((kh - 1) * W + (kw - 1)) * B      # row shift of this tap
                taps.append(row_shift(act, s) * mask[:, k:k + 1])
        im2col = jnp.concatenate(taps, axis=1)          # (M_pad, 9*Cin), dense
        y = jnp.dot(im2col, w_ref[...], preferred_element_type=jnp.float32)
        return jnp.maximum(y + b_ref[...], 0.0)

    def kernel(x_ref, mask_ref, w1_ref, b1_ref, w2_ref, b2_ref, w3_ref, b3_ref,
               wfc1_ref, bfc1_ref, wfc2_ref, bfc2_ref, out_ref):
        """Single grid point; whole problem (~0.35 MiB weights) resident in VMEM."""
        mask = mask_ref[...]
        a = conv3x3_relu(x_ref[...], w1_ref, b1_ref, mask)
        a = conv3x3_relu(a, w2_ref, b2_ref, mask)
        a = conv3x3_relu(a, w3_ref, b3_ref, mask)

        # torch.flatten(x, 1) + fc1: rows of each spatial position hw are
        # contiguous (hw-major rows), so flatten = HW static sublane slices +
        # one lane concat -> (B, HW*C); fc1 collapses to a single MXU matmul
        # against the (hw*C + c)-ordered weight built in prepare_params.
        flat = jnp.concatenate([a[hw * B:(hw + 1) * B, :] for hw in range(HW)],
                               axis=1)                  # (B, HW*C)
        h = jnp.dot(flat, wfc1_ref[...], preferred_element_type=jnp.float32)
        h = jnp.maximum(h + bfc1_ref[...], 0.0)

        # fc2 -- output lanes padded to 128 -> lane-dense store.
        out_ref[...] = (jnp.dot(h, wfc2_ref[...],
                                preferred_element_type=jnp.float32)
                        + bfc2_ref[...])

    return kernel


# ------------------------ one-time weight preparation ---------------------- #
def prepare_params(params, H, W, B):
    """Host-side weight/mask prep, executed ONCE (hoisted off the forward path)."""
    HW = H * W
    M = HW * B
    M_pad = -(-M // 8) * 8

    # 0/1 zero-padding validity mask per (row, tap); pad rows masked out.
    mask = np.zeros((M_pad, 9), np.float32)
    for hw in range(HW):
        h, w = divmod(hw, W)
        for k in range(9):
            kh, kw = divmod(k, 3)
            if 0 <= h + kh - 1 < H and 0 <= w + kw - 1 < W:
                mask[hw * B:(hw + 1) * B, k] = 1.0

    def conv_dense(w, b):
        # torch conv weight (Cout, Cin, 3, 3) -> dense (9*Cin, Cout),
        # row index = (kh*3 + kw)*Cin + cin  (matches im2col column order).
        w = np.asarray(w, np.float32)
        cout, cin = w.shape[0], w.shape[1]
        wd = w.transpose(2, 3, 1, 0).reshape(9 * cin, cout)
        return jnp.asarray(wd), jnp.asarray(np.asarray(b, np.float32).reshape(1, cout))

    w1, b1 = conv_dense(params["w1"], params["b1"])
    w2, b2 = conv_dense(params["w2"], params["b2"])
    w3, b3 = conv_dense(params["w3"], params["b3"])

    C = int(params["w3"].shape[0])          # 32 conv output channels
    F = int(params["wfc1"].shape[0])        # 128 fc1 units
    # torch fc1 weight (F, C*HW) with feature index c*HW + hw -> rows hw*C + c
    wfc1 = np.asarray(params["wfc1"], np.float32).reshape(F, C, HW)
    wfc1 = wfc1.transpose(2, 1, 0).reshape(HW * C, F)
    bfc1 = np.asarray(params["bfc1"], np.float32).reshape(1, F)

    A = int(params["wfc2"].shape[0])
    A_pad = -(-A // 128) * 128              # lane-dense output store
    wfc2 = np.zeros((F, A_pad), np.float32)
    wfc2[:, :A] = np.asarray(params["wfc2"], np.float32).T
    bfc2 = np.zeros((1, A_pad), np.float32)
    bfc2[0, :A] = np.asarray(params["bfc2"], np.float32)

    return {
        "mask": jnp.asarray(mask),
        "w1": w1, "b1": b1, "w2": w2, "b2": b2, "w3": w3, "b3": b3,
        "wfc1": jnp.asarray(wfc1), "bfc1": jnp.asarray(bfc1),
        "wfc2": jnp.asarray(wfc2), "bfc2": jnp.asarray(bfc2),
    }


# ------------------------------ JAX glue ---------------------------------- #
def neural_network_forward(x_nchw, prep, n_actions):
    B, Cin, H, W = x_nchw.shape
    HW = H * W
    M = HW * B
    M_pad = -(-M // 8) * 8

    # NCHW -> (HW*B, Cin) rows, r = (h*W + w)*B + b (layout plumbing only).
    x_rows = jnp.transpose(x_nchw, (2, 3, 0, 1)).reshape(M, Cin).astype(jnp.float32)
    if M_pad != M:
        x_rows = jnp.pad(x_rows, ((0, M_pad - M), (0, 0)))

    args = (x_rows, prep["mask"], prep["w1"], prep["b1"], prep["w2"], prep["b2"],
            prep["w3"], prep["b3"], prep["wfc1"], prep["bfc1"],
            prep["wfc2"], prep["bfc2"])

    C = int(prep["w3"].shape[1])            # 32
    F = int(prep["wfc1"].shape[1])          # 128
    A_pad = int(prep["wfc2"].shape[1])      # 128

    flops = 2 * (M_pad * 9 * Cin * C + 2 * M_pad * 9 * C * C
                 + B * HW * C * F + B * F * A_pad)
    bytes_accessed = int(sum(int(np.prod(a.shape)) * a.dtype.itemsize for a in args)
                         + B * A_pad * 4)

    out_pad = pl.pallas_call(
        make_kernel(H, W, B),
        out_shape=jax.ShapeDtypeStruct((B, A_pad), jnp.float32),
        in_specs=[pl.BlockSpec(memory_space=pltpu.MemorySpace.VMEM) for _ in args],
        out_specs=pl.BlockSpec(memory_space=pltpu.MemorySpace.VMEM),
        cost_estimate=pl.CostEstimate(flops=flops, transcendentals=0,
                                      bytes_accessed=bytes_accessed),
    )(*args)
    return out_pad[:, :n_actions]


# -------------------------- params / reference ---------------------------- #
def init_params(key, cin, H, W, n_actions):
    """Deterministic synthetic init (PyTorch-style uniform(-1/sqrt(fan_in), ...))."""
    def u(k, shape, fan_in):
        bound = 1.0 / np.sqrt(fan_in)
        return jax.random.uniform(k, shape, jnp.float32, -bound, bound)

    ks = jax.random.split(key, 10)
    flat = 32 * H * W
    return {
        "w1": u(ks[0], (32, cin, 3, 3), cin * 9), "b1": u(ks[1], (32,), cin * 9),
        "w2": u(ks[2], (32, 32, 3, 3), 32 * 9),   "b2": u(ks[3], (32,), 32 * 9),
        "w3": u(ks[4], (32, 32, 3, 3), 32 * 9),   "b3": u(ks[5], (32,), 32 * 9),
        "wfc1": u(ks[6], (128, flat), flat),      "bfc1": u(ks[7], (128,), flat),
        "wfc2": u(ks[8], (n_actions, 128), 128),  "bfc2": u(ks[9], (n_actions,), 128),
    }


def reference_forward(x, params):
    """Pure-JAX reference mirroring the PyTorch module exactly (f32)."""
    def conv(x, w, b):
        y = jax.lax.conv_general_dilated(
            x, w, window_strides=(1, 1), padding=((1, 1), (1, 1)),
            dimension_numbers=("NCHW", "OIHW", "NCHW"))
        return jax.nn.relu(y + b[None, :, None, None])

    a = conv(x, params["w1"], params["b1"])
    a = conv(a, params["w2"], params["b2"])
    a = conv(a, params["w3"], params["b3"])
    flat = a.reshape(a.shape[0], -1)                       # torch.flatten(x, 1)
    h = jax.nn.relu(flat @ params["wfc1"].T + params["bfc1"])
    return h @ params["wfc2"].T + params["bfc2"]


# --------------------------------- main ------------------------------------ #
if __name__ == "__main__":
    # size = len(observation_space_n) = 4, channels = 3 -> NCHW input (B, 4, 4, 3)
    B, Cin, H, W = 2, 4, 4, 3
    A = 5  # action_space_n

    key = jax.random.PRNGKey(0)
    kx, kp = jax.random.split(key)
    x = jax.random.normal(kx, (B, Cin, H, W), jnp.float32)
    params = init_params(kp, Cin, H, W, A)

    prep = prepare_params(params, H, W, B)   # one-time weight/mask prep (hoisted)

    out = neural_network_forward(x, prep, A)
    out = jax.block_until_ready(out)

    ref = reference_forward(x, params)
    np.testing.assert_allclose(np.asarray(out), np.asarray(ref),
                               rtol=1e-2, atol=1e-2)

    print("KERNEL_OK")
</pallas_src>

<mosaic_0001>
module attributes {stable_mosaic.version = 11 : i64} {
  func.func @kernel(%arg0: memref<24x4xf32, #tpu.memory_space<vmem>>, %arg1: memref<24x9xf32, #tpu.memory_space<vmem>>, %arg2: memref<36x32xf32, #tpu.memory_space<vmem>>, %arg3: memref<1x32xf32, #tpu.memory_space<vmem>>, %arg4: memref<288x32xf32, #tpu.memory_space<vmem>>, %arg5: memref<1x32xf32, #tpu.memory_space<vmem>>, %arg6: memref<288x32xf32, #tpu.memory_space<vmem>>, %arg7: memref<1x32xf32, #tpu.memory_space<vmem>>, %arg8: memref<384x128xf32, #tpu.memory_space<vmem>>, %arg9: memref<1x128xf32, #tpu.memory_space<vmem>>, %arg10: memref<128x128xf32, #tpu.memory_space<vmem>>, %arg11: memref<1x128xf32, #tpu.memory_space<vmem>>, %arg12: memref<2x128xf32, #tpu.memory_space<vmem>>) attributes {dimension_semantics = [], scalar_prefetch = 0 : i64, scratch_operands = 0 : i64, tpu.core_type = #tpu.core_type<tc>} {
    %c0 = arith.constant 0 : index
    %c0_0 = arith.constant 0 : index
    %0 = vector.load %arg1[%c0, %c0_0] : memref<24x9xf32, #tpu.memory_space<vmem>>, vector<24x9xf32>
    %c0_1 = arith.constant 0 : index
    %c0_2 = arith.constant 0 : index
    %1 = vector.load %arg0[%c0_1, %c0_2] : memref<24x4xf32, #tpu.memory_space<vmem>>, vector<24x4xf32>
    %cst = arith.constant 0.000000e+00 : f32
    %2 = vector.broadcast %cst : f32 to vector<8x4xf32>
    %3 = vector.extract_strided_slice %1 {offsets = [0, 0], sizes = [16, 4], strides = [1, 1]} : vector<24x4xf32> to vector<16x4xf32>
    %4 = tpu.concatenate %2, %3 in 0 : vector<8x4xf32>, vector<16x4xf32> -> vector<24x4xf32>
    %5 = vector.extract_strided_slice %0 {offsets = [0, 0], sizes = [24, 1], strides = [1, 1]} : vector<24x9xf32> to vector<24x1xf32>
    %6 = vector.broadcast %5 : vector<24x1xf32> to vector<24x4xf32>
    %7 = arith.mulf %4, %6 : vector<24x4xf32>
    %cst_3 = arith.constant 0.000000e+00 : f32
    %8 = vector.broadcast %cst_3 : f32 to vector<6x4xf32>
    %9 = vector.extract_strided_slice %1 {offsets = [0, 0], sizes = [18, 4], strides = [1, 1]} : vector<24x4xf32> to vector<18x4xf32>
    %10 = tpu.concatenate %8, %9 in 0 : vector<6x4xf32>, vector<18x4xf32> -> vector<24x4xf32>
    %11 = vector.extract_strided_slice %0 {offsets = [0, 1], sizes = [24, 1], strides = [1, 1]} : vector<24x9xf32> to vector<24x1xf32>
    %12 = vector.broadcast %11 : vector<24x1xf32> to vector<24x4xf32>
    %13 = arith.mulf %10, %12 : vector<24x4xf32>
    %cst_4 = arith.constant 0.000000e+00 : f32
    %14 = vector.broadcast %cst_4 : f32 to vector<4x4xf32>
    %15 = vector.extract_strided_slice %1 {offsets = [0, 0], sizes = [20, 4], strides = [1, 1]} : vector<24x4xf32> to vector<20x4xf32>
    %16 = tpu.concatenate %14, %15 in 0 : vector<4x4xf32>, vector<20x4xf32> -> vector<24x4xf32>
    %17 = vector.extract_strided_slice %0 {offsets = [0, 2], sizes = [24, 1], strides = [1, 1]} : vector<24x9xf32> to vector<24x1xf32>
    %18 = vector.broadcast %17 : vector<24x1xf32> to vector<24x4xf32>
    %19 = arith.mulf %16, %18 : vector<24x4xf32>
    %cst_5 = arith.constant 0.000000e+00 : f32
    %20 = vector.broadcast %cst_5 : f32 to vector<2x4xf32>
    %21 = vector.extract_strided_slice %1 {offsets = [0, 0], sizes = [22, 4], strides = [1, 1]} : vector<24x4xf32> to vector<22x4xf32>
    %22 = tpu.concatenate %20, %21 in 0 : vector<2x4xf32>, vector<22x4xf32> -> vector<24x4xf32>
    %23 = vector.extract_strided_slice %0 {offsets = [0, 3], sizes = [24, 1], strides = [1, 1]} : vector<24x9xf32> to vector<24x1xf32>
    %24 = vector.broadcast %23 : vector<24x1xf32> to vector<24x4xf32>
    %25 = arith.mulf %22, %24 : vector<24x4xf32>
    %26 = vector.extract_strided_slice %0 {offsets = [0, 4], sizes = [24, 1], strides = [1, 1]} : vector<24x9xf32> to vector<24x1xf32>
    %27 = vector.broadcast %26 : vector<24x1xf32> to vector<24x4xf32>
    %28 = arith.mulf %1, %27 : vector<24x4xf32>
    %cst_6 = arith.constant 0.000000e+00 : f32
    %29 = vector.broadcast %cst_6 : f32 to vector<2x4xf32>
    %30 = vector.extract_strided_slice %1 {offsets = [2, 0], sizes = [22, 4], strides = [1, 1]} : vector<24x4xf32> to vector<22x4xf32>
    %31 = tpu.concatenate %30, %29 in 0 : vector<22x4xf32>, vector<2x4xf32> -> vector<24x4xf32>
    %32 = vector.extract_strided_slice %0 {offsets = [0, 5], sizes = [24, 1], strides = [1, 1]} : vector<24x9xf32> to vector<24x1xf32>
    %33 = vector.broadcast %32 : vector<24x1xf32> to vector<24x4xf32>
    %34 = arith.mulf %31, %33 : vector<24x4xf32>
    %cst_7 = arith.constant 0.000000e+00 : f32
    %35 = vector.broadcast %cst_7 : f32 to vector<4x4xf32>
    %36 = vector.extract_strided_slice %1 {offsets = [4, 0], sizes = [20, 4], strides = [1, 1]} : vector<24x4xf32> to vector<20x4xf32>
    %37 = tpu.concatenate %36, %35 in 0 : vector<20x4xf32>, vector<4x4xf32> -> vector<24x4xf32>
    %38 = vector.extract_strided_slice %0 {offsets = [0, 6], sizes = [24, 1], strides = [1, 1]} : vector<24x9xf32> to vector<24x1xf32>
    %39 = vector.broadcast %38 : vector<24x1xf32> to vector<24x4xf32>
    %40 = arith.mulf %37, %39 : vector<24x4xf32>
    %cst_8 = arith.constant 0.000000e+00 : f32
    %41 = vector.broadcast %cst_8 : f32 to vector<6x4xf32>
    %42 = vector.extract_strided_slice %1 {offsets = [6, 0], sizes = [18, 4], strides = [1, 1]} : vector<24x4xf32> to vector<18x4xf32>
    %43 = tpu.concatenate %42, %41 in 0 : vector<18x4xf32>, vector<6x4xf32> -> vector<24x4xf32>
    %44 = vector.extract_strided_slice %0 {offsets = [0, 7], sizes = [24, 1], strides = [1, 1]} : vector<24x9xf32> to vector<24x1xf32>
    %45 = vector.broadcast %44 : vector<24x1xf32> to vector<24x4xf32>
    %46 = arith.mulf %43, %45 : vector<24x4xf32>
    %cst_9 = arith.constant 0.000000e+00 : f32
    %47 = vector.broadcast %cst_9 : f32 to vector<8x4xf32>
    %48 = vector.extract_strided_slice %1 {offsets = [8, 0], sizes = [16, 4], strides = [1, 1]} : vector<24x4xf32> to vector<16x4xf32>
    %49 = tpu.concatenate %48, %47 in 0 : vector<16x4xf32>, vector<8x4xf32> -> vector<24x4xf32>
    %50 = vector.extract_strided_slice %0 {offsets = [0, 8], sizes = [24, 1], strides = [1, 1]} : vector<24x9xf32> to vector<24x1xf32>
    %51 = vector.broadcast %50 : vector<24x1xf32> to vector<24x4xf32>
    %52 = arith.mulf %49, %51 : vector<24x4xf32>
    %53 = tpu.concatenate %7, %13, %19, %25, %28, %34, %40, %46, %52 in 1 : vector<24x4xf32>, vector<24x4xf32>, vector<24x4xf32>, vector<24x4xf32>, vector<24x4xf32>, vector<24x4xf32>, vector<24x4xf32>, vector<24x4xf32>, vector<24x4xf32> -> vector<24x36xf32>
    %c0_10 = arith.constant 0 : index
    %c0_11 = arith.constant 0 : index
    %54 = vector.load %arg2[%c0_10, %c0_11] : memref<36x32xf32, #tpu.memory_space<vmem>>, vector<36x32xf32>
    %cst_12 = arith.constant dense<0.000000e+00> : vector<24x32xf32>
    %55 = tpu.matmul %53, %54, %cst_12 {dimension_numbers = #tpu.dot_dimension_numbers<[1], [0], [0], [1], [0, 0, 1, 1], [], []>} : vector<24x36xf32>, vector<36x32xf32>, vector<24x32xf32> -> vector<24x32xf32>
    %c0_13 = arith.constant 0 : index
    %c0_14 = arith.constant 0 : index
    %56 = vector.load %arg3[%c0_13, %c0_14] : memref<1x32xf32, #tpu.memory_space<vmem>>, vector<1x32xf32>
    %57 = vector.broadcast %56 : vector<1x32xf32> to vector<24x32xf32>
    %58 = arith.addf %55, %57 : vector<24x32xf32>
    %cst_15 = arith.constant 0.000000e+00 : f32
    %59 = vector.broadcast %cst_15 : f32 to vector<24x32xf32>
    %60 = arith.maximumf %58, %59 : vector<24x32xf32>
    %cst_16 = arith.constant 0.000000e+00 : f32
    %61 = vector.broadcast %cst_16 : f32 to vector<8x32xf32>
    %62 = vector.extract_strided_slice %60 {offsets = [0, 0], sizes = [16, 32], strides = [1, 1]} : vector<24x32xf32> to vector<16x32xf32>
    %63 = tpu.concatenate %61, %62 in 0 : vector<8x32xf32>, vector<16x32xf32> -> vector<24x32xf32>
    %64 = vector.extract_strided_slice %0 {offsets = [0, 0], sizes = [24, 1], strides = [1, 1]} : vector<24x9xf32> to vector<24x1xf32>
    %65 = vector.broadcast %64 : vector<24x1xf32> to vector<24x32xf32>
    %66 = arith.mulf %63, %65 : vector<24x32xf32>
    %cst_17 = arith.constant 0.000000e+00 : f32
    %67 = vector.broadcast %cst_17 : f32 to vector<6x32xf32>
    %68 = vector.extract_strided_slice %60 {offsets = [0, 0], sizes = [18, 32], strides = [1, 1]} : vector<24x32xf32> to vector<18x32xf32>
    %69 = tpu.concatenate %67, %68 in 0 : vector<6x32xf32>, vector<18x32xf32> -> vector<24x32xf32>
    %70 = vector.extract_strided_slice %0 {offsets = [0, 1], sizes = [24, 1], strides = [1, 1]} : vector<24x9xf32> to vector<24x1xf32>
    %71 = vector.broadcast %70 : vector<24x1xf32> to vector<24x32xf32>
    %72 = arith.mulf %69, %71 : vector<24x32xf32>
    %cst_18 = arith.constant 0.000000e+00 : f32
    %73 = vector.broadcast %cst_18 : f32 to vector<4x32xf32>
    %74 = vector.extract_strided_slice %60 {offsets = [0, 0], sizes = [20, 32], strides = [1, 1]} : vector<24x32xf32> to vector<20x32xf32>
    %75 = tpu.concatenate %73, %74 in 0 : vector<4x32xf32>, vector<20x32xf32> -> vector<24x32xf32>
    %76 = vector.extract_strided_slice %0 {offsets = [0, 2], sizes = [24, 1], strides = [1, 1]} : vector<24x9xf32> to vector<24x1xf32>
    %77 = vector.broadcast %76 : vector<24x1xf32> to vector<24x32xf32>
    %78 = arith.mulf %75, %77 : vector<24x32xf32>
    %cst_19 = arith.constant 0.000000e+00 : f32
    %79 = vector.broadcast %cst_19 : f32 to vector<2x32xf32>
    %80 = vector.extract_strided_slice %60 {offsets = [0, 0], sizes = [22, 32], strides = [1, 1]} : vector<24x32xf32> to vector<22x32xf32>
    %81 = tpu.concatenate %79, %80 in 0 : vector<2x32xf32>, vector<22x32xf32> -> vector<24x32xf32>
    %82 = vector.extract_strided_slice %0 {offsets = [0, 3], sizes = [24, 1], strides = [1, 1]} : vector<24x9xf32> to vector<24x1xf32>
    %83 = vector.broadcast %82 : vector<24x1xf32> to vector<24x32xf32>
    %84 = arith.mulf %81, %83 : vector<24x32xf32>
    %85 = vector.extract_strided_slice %0 {offsets = [0, 4], sizes = [24, 1], strides = [1, 1]} : vector<24x9xf32> to vector<24x1xf32>
    %86 = vector.broadcast %85 : vector<24x1xf32> to vector<24x32xf32>
    %87 = arith.mulf %60, %86 : vector<24x32xf32>
    %cst_20 = arith.constant 0.000000e+00 : f32
    %88 = vector.broadcast %cst_20 : f32 to vector<2x32xf32>
    %89 = vector.extract_strided_slice %60 {offsets = [2, 0], sizes = [22, 32], strides = [1, 1]} : vector<24x32xf32> to vector<22x32xf32>
    %90 = tpu.concatenate %89, %88 in 0 : vector<22x32xf32>, vector<2x32xf32> -> vector<24x32xf32>
    %91 = vector.extract_strided_slice %0 {offsets = [0, 5], sizes = [24, 1], strides = [1, 1]} : vector<24x9xf32> to vector<24x1xf32>
    %92 = vector.broadcast %91 : vector<24x1xf32> to vector<24x32xf32>
    %93 = arith.mulf %90, %92 : vector<24x32xf32>
    %cst_21 = arith.constant 0.000000e+00 : f32
    %94 = vector.broadcast %cst_21 : f32 to vector<4x32xf32>
    %95 = vector.extract_strided_slice %60 {offsets = [4, 0], sizes = [20, 32], strides = [1, 1]} : vector<24x32xf32> to vector<20x32xf32>
    %96 = tpu.concatenate %95, %94 in 0 : vector<20x32xf32>, vector<4x32xf32> -> vector<24x32xf32>
    %97 = vector.extract_strided_slice %0 {offsets = [0, 6], sizes = [24, 1], strides = [1, 1]} : vector<24x9xf32> to vector<24x1xf32>
    %98 = vector.broadcast %97 : vector<24x1xf32> to vector<24x32xf32>
    %99 = arith.mulf %96, %98 : vector<24x32xf32>
    %cst_22 = arith.constant 0.000000e+00 : f32
    %100 = vector.broadcast %cst_22 : f32 to vector<6x32xf32>
    %101 = vector.extract_strided_slice %60 {offsets = [6, 0], sizes = [18, 32], strides = [1, 1]} : vector<24x32xf32> to vector<18x32xf32>
    %102 = tpu.concatenate %101, %100 in 0 : vector<18x32xf32>, vector<6x32xf32> -> vector<24x32xf32>
    %103 = vector.extract_strided_slice %0 {offsets = [0, 7], sizes = [24, 1], strides = [1, 1]} : vector<24x9xf32> to vector<24x1xf32>
    %104 = vector.broadcast %103 : vector<24x1xf32> to vector<24x32xf32>
    %105 = arith.mulf %102, %104 : vector<24x32xf32>
    %cst_23 = arith.constant 0.000000e+00 : f32
    %106 = vector.broadcast %cst_23 : f32 to vector<8x32xf32>
    %107 = vector.extract_strided_slice %60 {offsets = [8, 0], sizes = [16, 32], strides = [1, 1]} : vector<24x32xf32> to vector<16x32xf32>
    %108 = tpu.concatenate %107, %106 in 0 : vector<16x32xf32>, vector<8x32xf32> -> vector<24x32xf32>
    %109 = vector.extract_strided_slice %0 {offsets = [0, 8], sizes = [24, 1], strides = [1, 1]} : vector<24x9xf32> to vector<24x1xf32>
    %110 = vector.broadcast %109 : vector<24x1xf32> to vector<24x32xf32>
    %111 = arith.mulf %108, %110 : vector<24x32xf32>
    %112 = tpu.concatenate %66, %72, %78, %84, %87, %93, %99, %105, %111 in 1 : vector<24x32xf32>, vector<24x32xf32>, vector<24x32xf32>, vector<24x32xf32>, vector<24x32xf32>, vector<24x32xf32>, vector<24x32xf32>, vector<24x32xf32>, vector<24x32xf32> -> vector<24x288xf32>
    %c0_24 = arith.constant 0 : index
    %c0_25 = arith.constant 0 : index
    %113 = vector.load %arg4[%c0_24, %c0_25] : memref<288x32xf32, #tpu.memory_space<vmem>>, vector<288x32xf32>
    %cst_26 = arith.constant dense<0.000000e+00> : vector<24x32xf32>
    %114 = tpu.matmul %112, %113, %cst_26 {dimension_numbers = #tpu.dot_dimension_numbers<[1], [0], [0], [1], [0, 0, 1, 1], [], []>} : vector<24x288xf32>, vector<288x32xf32>, vector<24x32xf32> -> vector<24x32xf32>
    %c0_27 = arith.constant 0 : index
    %c0_28 = arith.constant 0 : index
    %115 = vector.load %arg5[%c0_27, %c0_28] : memref<1x32xf32, #tpu.memory_space<vmem>>, vector<1x32xf32>
    %116 = vector.broadcast %115 : vector<1x32xf32> to vector<24x32xf32>
    %117 = arith.addf %114, %116 : vector<24x32xf32>
    %cst_29 = arith.constant 0.000000e+00 : f32
    %118 = vector.broadcast %cst_29 : f32 to vector<24x32xf32>
    %119 = arith.maximumf %117, %118 : vector<24x32xf32>
    %cst_30 = arith.constant 0.000000e+00 : f32
    %120 = vector.broadcast %cst_30 : f32 to vector<8x32xf32>
    %121 = vector.extract_strided_slice %119 {offsets = [0, 0], sizes = [16, 32], strides = [1, 1]} : vector<24x32xf32> to vector<16x32xf32>
    %122 = tpu.concatenate %120, %121 in 0 : vector<8x32xf32>, vector<16x32xf32> -> vector<24x32xf32>
    %123 = vector.extract_strided_slice %0 {offsets = [0, 0], sizes = [24, 1], strides = [1, 1]} : vector<24x9xf32> to vector<24x1xf32>
    %124 = vector.broadcast %123 : vector<24x1xf32> to vector<24x32xf32>
    %125 = arith.mulf %122, %124 : vector<24x32xf32>
    %cst_31 = arith.constant 0.000000e+00 : f32
    %126 = vector.broadcast %cst_31 : f32 to vector<6x32xf32>
    %127 = vector.extract_strided_slice %119 {offsets = [0, 0], sizes = [18, 32], strides = [1, 1]} : vector<24x32xf32> to vector<18x32xf32>
    %128 = tpu.concatenate %126, %127 in 0 : vector<6x32xf32>, vector<18x32xf32> -> vector<24x32xf32>
    %129 = vector.extract_strided_slice %0 {offsets = [0, 1], sizes = [24, 1], strides = [1, 1]} : vector<24x9xf32> to vector<24x1xf32>
    %130 = vector.broadcast %129 : vector<24x1xf32> to vector<24x32xf32>
    %131 = arith.mulf %128, %130 : vector<24x32xf32>
    %cst_32 = arith.constant 0.000000e+00 : f32
    %132 = vector.broadcast %cst_32 : f32 to vector<4x32xf32>
    %133 = vector.extract_strided_slice %119 {offsets = [0, 0], sizes = [20, 32], strides = [1, 1]} : vector<24x32xf32> to vector<20x32xf32>
    %134 = tpu.concatenate %132, %133 in 0 : vector<4x32xf32>, vector<20x32xf32> -> vector<24x32xf32>
    %135 = vector.extract_strided_slice %0 {offsets = [0, 2], sizes = [24, 1], strides = [1, 1]} : vector<24x9xf32> to vector<24x1xf32>
    %136 = vector.broadcast %135 : vector<24x1xf32> to vector<24x32xf32>
    %137 = arith.mulf %134, %136 : vector<24x32xf32>
    %cst_33 = arith.constant 0.000000e+00 : f32
    %138 = vector.broadcast %cst_33 : f32 to vector<2x32xf32>
    %139 = vector.extract_strided_slice %119 {offsets = [0, 0], sizes = [22, 32], strides = [1, 1]} : vector<24x32xf32> to vector<22x32xf32>
    %140 = tpu.concatenate %138, %139 in 0 : vector<2x32xf32>, vector<22x32xf32> -> vector<24x32xf32>
    %141 = vector.extract_strided_slice %0 {offsets = [0, 3], sizes = [24, 1], strides = [1, 1]} : vector<24x9xf32> to vector<24x1xf32>
    %142 = vector.broadcast %141 : vector<24x1xf32> to vector<24x32xf32>
    %143 = arith.mulf %140, %142 : vector<24x32xf32>
    %144 = vector.extract_strided_slice %0 {offsets = [0, 4], sizes = [24, 1], strides = [1, 1]} : vector<24x9xf32> to vector<24x1xf32>
    %145 = vector.broadcast %144 : vector<24x1xf32> to vector<24x32xf32>
    %146 = arith.mulf %119, %145 : vector<24x32xf32>
    %cst_34 = arith.constant 0.000000e+00 : f32
    %147 = vector.broadcast %cst_34 : f32 to vector<2x32xf32>
    %148 = vector.extract_strided_slice %119 {offsets = [2, 0], sizes = [22, 32], strides = [1, 1]} : vector<24x32xf32> to vector<22x32xf32>
    %149 = tpu.concatenate %148, %147 in 0 : vector<22x32xf32>, vector<2x32xf32> -> vector<24x32xf32>
    %150 = vector.extract_strided_slice %0 {offsets = [0, 5], sizes = [24, 1], strides = [1, 1]} : vector<24x9xf32> to vector<24x1xf32>
    %151 = vector.broadcast %150 : vector<24x1xf32> to vector<24x32xf32>
    %152 = arith.mulf %149, %151 : vector<24x32xf32>
    %cst_35 = arith.constant 0.000000e+00 : f32
    %153 = vector.broadcast %cst_35 : f32 to vector<4x32xf32>
    %154 = vector.extract_strided_slice %119 {offsets = [4, 0], sizes = [20, 32], strides = [1, 1]} : vector<24x32xf32> to vector<20x32xf32>
    %155 = tpu.concatenate %154, %153 in 0 : vector<20x32xf32>, vector<4x32xf32> -> vector<24x32xf32>
    %156 = vector.extract_strided_slice %0 {offsets = [0, 6], sizes = [24, 1], strides = [1, 1]} : vector<24x9xf32> to vector<24x1xf32>
    %157 = vector.broadcast %156 : vector<24x1xf32> to vector<24x32xf32>
    %158 = arith.mulf %155, %157 : vector<24x32xf32>
    %cst_36 = arith.constant 0.000000e+00 : f32
    %159 = vector.broadcast %cst_36 : f32 to vector<6x32xf32>
    %160 = vector.extract_strided_slice %119 {offsets = [6, 0], sizes = [18, 32], strides = [1, 1]} : vector<24x32xf32> to vector<18x32xf32>
    %161 = tpu.concatenate %160, %159 in 0 : vector<18x32xf32>, vector<6x32xf32> -> vector<24x32xf32>
    %162 = vector.extract_strided_slice %0 {offsets = [0, 7], sizes = [24, 1], strides = [1, 1]} : vector<24x9xf32> to vector<24x1xf32>
    %163 = vector.broadcast %162 : vector<24x1xf32> to vector<24x32xf32>
    %164 = arith.mulf %161, %163 : vector<24x32xf32>
    %cst_37 = arith.constant 0.000000e+00 : f32
    %165 = vector.broadcast %cst_37 : f32 to vector<8x32xf32>
    %166 = vector.extract_strided_slice %119 {offsets = [8, 0], sizes = [16, 32], strides = [1, 1]} : vector<24x32xf32> to vector<16x32xf32>
    %167 = tpu.concatenate %166, %165 in 0 : vector<16x32xf32>, vector<8x32xf32> -> vector<24x32xf32>
    %168 = vector.extract_strided_slice %0 {offsets = [0, 8], sizes = [24, 1], strides = [1, 1]} : vector<24x9xf32> to vector<24x1xf32>
    %169 = vector.broadcast %168 : vector<24x1xf32> to vector<24x32xf32>
    %170 = arith.mulf %167, %169 : vector<24x32xf32>
    %171 = tpu.concatenate %125, %131, %137, %143, %146, %152, %158, %164, %170 in 1 : vector<24x32xf32>, vector<24x32xf32>, vector<24x32xf32>, vector<24x32xf32>, vector<24x32xf32>, vector<24x32xf32>, vector<24x32xf32>, vector<24x32xf32>, vector<24x32xf32> -> vector<24x288xf32>
    %c0_38 = arith.constant 0 : index
    %c0_39 = arith.constant 0 : index
    %172 = vector.load %arg6[%c0_38, %c0_39] : memref<288x32xf32, #tpu.memory_space<vmem>>, vector<288x32xf32>
    %cst_40 = arith.constant dense<0.000000e+00> : vector<24x32xf32>
    %173 = tpu.matmul %171, %172, %cst_40 {dimension_numbers = #tpu.dot_dimension_numbers<[1], [0], [0], [1], [0, 0, 1, 1], [], []>} : vector<24x288xf32>, vector<288x32xf32>, vector<24x32xf32> -> vector<24x32xf32>
    %c0_41 = arith.constant 0 : index
    %c0_42 = arith.constant 0 : index
    %174 = vector.load %arg7[%c0_41, %c0_42] : memref<1x32xf32, #tpu.memory_space<vmem>>, vector<1x32xf32>
    %175 = vector.broadcast %174 : vector<1x32xf32> to vector<24x32xf32>
    %176 = arith.addf %173, %175 : vector<24x32xf32>
    %cst_43 = arith.constant 0.000000e+00 : f32
    %177 = vector.broadcast %cst_43 : f32 to vector<24x32xf32>
    %178 = arith.maximumf %176, %177 : vector<24x32xf32>
    %179 = vector.extract_strided_slice %178 {offsets = [0, 0], sizes = [2, 32], strides = [1, 1]} : vector<24x32xf32> to vector<2x32xf32>
    %180 = vector.extract_strided_slice %178 {offsets = [2, 0], sizes = [2, 32], strides = [1, 1]} : vector<24x32xf32> to vector<2x32xf32>
    %181 = vector.extract_strided_slice %178 {offsets = [4, 0], sizes = [2, 32], strides = [1, 1]} : vector<24x32xf32> to vector<2x32xf32>
    %182 = vector.extract_strided_slice %178 {offsets = [6, 0], sizes = [2, 32], strides = [1, 1]} : vector<24x32xf32> to vector<2x32xf32>
    %183 = vector.extract_strided_slice %178 {offsets = [8, 0], sizes = [2, 32], strides = [1, 1]} : vector<24x32xf32> to vector<2x32xf32>
    %184 = vector.extract_strided_slice %178 {offsets = [10, 0], sizes = [2, 32], strides = [1, 1]} : vector<24x32xf32> to vector<2x32xf32>
    %185 = vector.extract_strided_slice %178 {offsets = [12, 0], sizes = [2, 32], strides = [1, 1]} : vector<24x32xf32> to vector<2x32xf32>
    %186 = vector.extract_strided_slice %178 {offsets = [14, 0], sizes = [2, 32], strides = [1, 1]} : vector<24x32xf32> to vector<2x32xf32>
    %187 = vector.extract_strided_slice %178 {offsets = [16, 0], sizes = [2, 32], strides = [1, 1]} : vector<24x32xf32> to vector<2x32xf32>
    %188 = vector.extract_strided_slice %178 {offsets = [18, 0], sizes = [2, 32], strides = [1, 1]} : vector<24x32xf32> to vector<2x32xf32>
    %189 = vector.extract_strided_slice %178 {offsets = [20, 0], sizes = [2, 32], strides = [1, 1]} : vector<24x32xf32> to vector<2x32xf32>
    %190 = vector.extract_strided_slice %178 {offsets = [22, 0], sizes = [2, 32], strides = [1, 1]} : vector<24x32xf32> to vector<2x32xf32>
    %191 = tpu.concatenate %179, %180, %181, %182, %183, %184, %185, %186, %187, %188, %189, %190 in 1 : vector<2x32xf32>, vector<2x32xf32>, vector<2x32xf32>, vector<2x32xf32>, vector<2x32xf32>, vector<2x32xf32>, vector<2x32xf32>, vector<2x32xf32>, vector<2x32xf32>, vector<2x32xf32>, vector<2x32xf32>, vector<2x32xf32> -> vector<2x384xf32>
    %c0_44 = arith.constant 0 : index
    %c0_45 = arith.constant 0 : index
    %192 = vector.load %arg8[%c0_44, %c0_45] : memref<384x128xf32, #tpu.memory_space<vmem>>, vector<384x128xf32>
    %cst_46 = arith.constant dense<0.000000e+00> : vector<2x128xf32>
    %193 = tpu.matmul %191, %192, %cst_46 {dimension_numbers = #tpu.dot_dimension_numbers<[1], [0], [0], [1], [0, 0, 1, 1], [], []>} : vector<2x384xf32>, vector<384x128xf32>, vector<2x128xf32> -> vector<2x128xf32>
    %c0_47 = arith.constant 0 : index
    %c0_48 = arith.constant 0 : index
    %194 = vector.load %arg9[%c0_47, %c0_48] : memref<1x128xf32, #tpu.memory_space<vmem>>, vector<1x128xf32>
    %195 = vector.broadcast %194 : vector<1x128xf32> to vector<2x128xf32>
    %196 = arith.addf %193, %195 : vector<2x128xf32>
    %cst_49 = arith.constant 0.000000e+00 : f32
    %197 = vector.broadcast %cst_49 : f32 to vector<2x128xf32>
    %198 = arith.maximumf %196, %197 : vector<2x128xf32>
    %c0_50 = arith.constant 0 : index
    %c0_51 = arith.constant 0 : index
    %199 = vector.load %arg10[%c0_50, %c0_51] : memref<128x128xf32, #tpu.memory_space<vmem>>, vector<128x128xf32>
    %cst_52 = arith.constant dense<0.000000e+00> : vector<2x128xf32>
    %200 = tpu.matmul %198, %199, %cst_52 {dimension_numbers = #tpu.dot_dimension_numbers<[1], [0], [0], [1], [0, 0, 1, 1], [], []>} : vector<2x128xf32>, vector<128x128xf32>, vector<2x128xf32> -> vector<2x128xf32>
    %c0_53 = arith.constant 0 : index
    %c0_54 = arith.constant 0 : index
    %201 = vector.load %arg11[%c0_53, %c0_54] : memref<1x128xf32, #tpu.memory_space<vmem>>, vector<1x128xf32>
    %202 = vector.broadcast %201 : vector<1x128xf32> to vector<2x128xf32>
    %203 = arith.addf %200, %202 : vector<2x128xf32>
    %c0_55 = arith.constant 0 : index
    %c0_56 = arith.constant 0 : index
    %204 = vector.load %arg12[%c0_55, %c0_56] : memref<2x128xf32, #tpu.memory_space<vmem>>, vector<2x128xf32>
    tpu.vector_store %arg12[%c0_55, %c0_56], %203 {strides = array<i32>} : memref<2x128xf32, #tpu.memory_space<vmem>>, vector<2x128xf32>,
    return
  }
}

</mosaic_0001>

<llo_original>
// kernel: tpu_custom_call.1
$region0: #{tpu_custom_call.1}
  #allocation0 [shape = 'u32[]', space=smem, size = 0x4, offset = 0x4, fixed_abs, tag = 'smem constant byte address 0x4 - core index']
  #allocation1 [shape = 'u32[144,128]{1,0:T(1,128)}', space=vmem, size = 0x12000, scoped, tag = 'internal scratch']
  %s0 = inlined_call_operand.vmem [shape: f32[24,4], index: 0, kind: input, shape index: {}]
  %s1 = inlined_call_operand.vmem [shape: f32[24,9], index: 1, kind: input, shape index: {}]
  %s2 = inlined_call_operand.vmem [shape: f32[36,32], index: 2, kind: input, shape index: {}]
  %s3 = inlined_call_operand.vmem [shape: f32[1,32], index: 3, kind: input, shape index: {}]
  %s4 = inlined_call_operand.vmem [shape: f32[288,32], index: 4, kind: input, shape index: {}]
  %s5 = inlined_call_operand.vmem [shape: f32[1,32], index: 5, kind: input, shape index: {}]
  %s6 = inlined_call_operand.vmem [shape: f32[288,32], index: 6, kind: input, shape index: {}]
  %s7 = inlined_call_operand.vmem [shape: f32[1,32], index: 7, kind: input, shape index: {}]
  %s8 = inlined_call_operand.vmem [shape: f32[384,128], index: 8, kind: input, shape index: {}]
  %s9 = inlined_call_operand.vmem [shape: f32[1,128], index: 9, kind: input, shape index: {}]
  %s10 = inlined_call_operand.vmem [shape: f32[128,128], index: 10, kind: input, shape index: {}]
  %s11 = inlined_call_operand.vmem [shape: f32[1,128], index: 11, kind: input, shape index: {}]
  %s12 = inlined_call_operand.hbm [shape: f32[2,128], index: 12, kind: output, shape index: {}]
  %s13 = sld [smem:[#allocation0]]
  $region58: #{tpu_custom_call.1} parent=0
    _
  %s15 = ssub.s32 1, %s13
  %s16 = scalar_select 0, %s15, %s13
  $region1: #{tpu_custom_call.1} parent=0
    #allocation2 [shape = 'u8[1024]{0}', space=vmem, size = 0x400, scoped, tag = 'output window, operand 0, single buffered']
    #allocation3 [shape = 's32[1]{0}', space=sflag, size = 0x4, scoped, tag = 'scoped memory for tpu_custom_call.1']
    %17 = vsyncpa [#allocation3], 0
    // Predicated region
    $region2: #{tpu_custom_call.1} parent=1 // pred_check
      _
    $region3: #{tpu_custom_call.1} parent=1 // pred_check_branch
      %19 = sbr.rel (0) target = $region5
    $region4: #{tpu_custom_call.1} parent=1 // pred_region
      _
    $region5: #{tpu_custom_call.1} parent=1 // pred_fallthru
      _
    // Predicated region
    $region6: #{tpu_custom_call.1} parent=1 // pred_check
      _
    $region7: #{tpu_custom_call.1} parent=1 // pred_check_branch
      %21 = sbr.rel (0) target = $region9
    $region8: #{tpu_custom_call.1} parent=1 // pred_region
      _
    $region9: #{tpu_custom_call.1} parent=1 // pred_fallthru
      _
    // Predicated region
    $region10: #{tpu_custom_call.1} parent=1 // pred_check
      _
    $region11: #{tpu_custom_call.1} parent=1 // pred_check_branch
      %23 = sbr.rel (0) target = $region13
    $region12: #{tpu_custom_call.1} parent=1 // pred_region
      _
    $region13: #{tpu_custom_call.1} parent=1 // pred_fallthru
      _
    // Predicated region
    $region14: #{tpu_custom_call.1} parent=1 // pred_check
      _
    $region15: #{tpu_custom_call.1} parent=1 // pred_check_branch
      %25 = sbr.rel (0) target = $region17
    $region16: #{tpu_custom_call.1} parent=1 // pred_region
      _
    $region17: #{tpu_custom_call.1} parent=1 // pred_fallthru
      _
    // Predicated region
    $region18: #{tpu_custom_call.1} parent=1 // pred_check
      _
    $region19: #{tpu_custom_call.1} parent=1 // pred_check_branch
      %27 = sbr.rel (0) target = $region21
    $region20: #{tpu_custom_call.1} parent=1 // pred_region
      _
    $region21: #{tpu_custom_call.1} parent=1 // pred_fallthru
      _
    // Predicated region
    $region22: #{tpu_custom_call.1} parent=1 // pred_check
      _
    $region23: #{tpu_custom_call.1} parent=1 // pred_check_branch
      %29 = sbr.rel (0) target = $region25
    $region24: #{tpu_custom_call.1} parent=1 // pred_region
      _
    $region25: #{tpu_custom_call.1} parent=1 // pred_fallthru
      _
    // Predicated region
    $region26: #{tpu_custom_call.1} parent=1 // pred_check
      _
    $region27: #{tpu_custom_call.1} parent=1 // pred_check_branch
      %31 = sbr.rel (0) target = $region29
    $region28: #{tpu_custom_call.1} parent=1 // pred_region
      _
    $region29: #{tpu_custom_call.1} parent=1 // pred_fallthru
      _
    // Predicated region
    $region30: #{tpu_custom_call.1} parent=1 // pred_check
      _
    $region31: #{tpu_custom_call.1} parent=1 // pred_check_branch
      %33 = sbr.rel (0) target = $region33
    $region32: #{tpu_custom_call.1} parent=1 // pred_region
      _
    $region33: #{tpu_custom_call.1} parent=1 // pred_fallthru
      _
    // Predicated region
    $region34: #{tpu_custom_call.1} parent=1 // pred_check
      _
    $region35: #{tpu_custom_call.1} parent=1 // pred_check_branch
      %35 = sbr.rel (0) target = $region37
    $region36: #{tpu_custom_call.1} parent=1 // pred_region
      _
    $region37: #{tpu_custom_call.1} parent=1 // pred_fallthru
      _
    // Predicated region
    $region38: #{tpu_custom_call.1} parent=1 // pred_check
      _
    $region39: #{tpu_custom_call.1} parent=1 // pred_check_branch
      %37 = sbr.rel (0) target = $region41
    $region40: #{tpu_custom_call.1} parent=1 // pred_region
      _
    $region41: #{tpu_custom_call.1} parent=1 // pred_fallthru
      _
    // Predicated region
    $region42: #{tpu_custom_call.1} parent=1 // pred_check
      _
    $region43: #{tpu_custom_call.1} parent=1 // pred_check_branch
      %39 = sbr.rel (0) target = $region45
    $region44: #{tpu_custom_call.1} parent=1 // pred_region
      _
    $region45: #{tpu_custom_call.1} parent=1 // pred_fallthru
      _
    // Predicated region
    $region46: #{tpu_custom_call.1} parent=1 // pred_check
      _
    $region47: #{tpu_custom_call.1} parent=1 // pred_check_branch
      %41 = sbr.rel (0) target = $region49
    $region48: #{tpu_custom_call.1} parent=1 // pred_region
      _
    $region49: #{tpu_custom_call.1} parent=1 // pred_fallthru
      _
    %v42 = vld [vmem:[%s1] sm:$0xff]
    %v43 = vld [vmem:[%s1 + $0x8] sm:$0xff]
    %v44 = vld [vmem:[%s1 + $0x10] sm:$0xff]
    %v45 = vld [vmem:[%s0] sm:$0xff]
    %v46 = vld [vmem:[%s0 + $0x8] sm:$0xff]
    %v47 = vld [vmem:[%s0 + $0x10] sm:$0xff]
    %49 = vset.pattern.permute.xlu0 0
    %50 = vperm.xlu0 %49, %v42
    %v51 = vpop.permute.xlu0 %50
    %54 = vset.pattern.permute.xlu0 0
    %55 = vperm.xlu0 %54, %v43
    %v56 = vpop.permute.xlu0 %55
    %59 = vset.pattern.permute.xlu0 0
    %60 = vperm.xlu0 %59, %v44
    %v61 = vpop.permute.xlu0 %60
    %v63 = vmul.f32 %v51, 0.0
    %v64 = vmul.f32 %v45, %v56
    %v65 = vmul.f32 %v46, %v61
    %vm69 = vcmask 1045504
    %v70 = vrot.slane %v45, 2
    %v71 = vrot.slane %v46, 2
    %v72 = vsel %vm69, %v70, %v71
    %v73 = vrot.slane %v47, 2
    %v74 = vsel %vm69, %v71, %v73
    %v78 = vsel %vm69, 0.0, %v70
    %79 = vset.pattern.permute.xlu0 1
    %80 = vperm.xlu0 %79, %v42
    %v81 = vpop.permute.xlu0 %80
    %83 = vset.pattern.permute.xlu0 1
    %84 = vperm.xlu0 %83, %v43
    %v85 = vpop.permute.xlu0 %84
    %87 = vset.pattern.permute.xlu0 1
    %88 = vperm.xlu0 %87, %v44
    %v89 = vpop.permute.xlu0 %88
    %v91 = vmul.f32 %v78, %v81
    %v92 = vmul.f32 %v72, %v85
    %v93 = vmul.f32 %v74, %v89
    %vm94 = vcmask 1043456
    %v95 = vrot.slane %v45, 4
    %v96 = vrot.slane %v46, 4
    %v97 = vsel %vm94, %v95, %v96
    %v98 = vrot.slane %v47, 4
    %v99 = vsel %vm94, %v96, %v98
    %v103 = vsel %vm94, 0.0, %v95
    %104 = vset.pattern.permute.xlu0 2
    %105 = vperm.xlu0 %104, %v42
    %v106 = vpop.permute.xlu0 %105
    %108 = vset.pattern.permute.xlu0 2
    %109 = vperm.xlu0 %108, %v43
    %v110 = vpop.permute.xlu0 %109
    %112 = vset.pattern.permute.xlu0 2
    %113 = vperm.xlu0 %112, %v44
    %v114 = vpop.permute.xlu0 %113
    %v116 = vmul.f32 %v103, %v106
    %v117 = vmul.f32 %v97, %v110
    %v118 = vmul.f32 %v99, %v114
    %vm119 = vcmask 1041408
    %v120 = vrot.slane %v45, 6
    %v121 = vrot.slane %v46, 6
    %v122 = vsel %vm119, %v120, %v121
    %v123 = vrot.slane %v47, 6
    %v124 = vsel %vm119, %v121, %v123
    %v128 = vsel %vm119, 0.0, %v120
    %129 = vset.pattern.permute.xlu0 3
    %130 = vperm.xlu0 %129, %v42
    %v131 = vpop.permute.xlu0 %130
    %133 = vset.pattern.permute.xlu0 3
    %134 = vperm.xlu0 %133, %v43
    %v135 = vpop.permute.xlu0 %134
    %137 = vset.pattern.permute.xlu0 3
    %138 = vperm.xlu0 %137, %v44
    %v139 = vpop.permute.xlu0 %138
    %v141 = vmul.f32 %v128, %v131
    %v142 = vmul.f32 %v122, %v135
    %v143 = vmul.f32 %v124, %v139
    %144 = vset.pattern.permute.xlu0 4
    %145 = vperm.xlu0 %144, %v42
    %v146 = vpop.permute.xlu0 %145
    %148 = vset.pattern.permute.xlu0 4
    %149 = vperm.xlu0 %148, %v43
    %v150 = vpop.permute.xlu0 %149
    %152 = vset.pattern.permute.xlu0 4
    %153 = vperm.xlu0 %152, %v44
    %v154 = vpop.permute.xlu0 %153
    %v156 = vmul.f32 %v45, %v146
    %v157 = vmul.f32 %v46, %v150
    %v158 = vmul.f32 %v47, %v154
    %v160 = vsel %vm69, %v73, 0.0
    %161 = vset.pattern.permute.xlu0 5
    %162 = vperm.xlu0 %161, %v42
    %v163 = vpop.permute.xlu0 %162
    %165 = vset.pattern.permute.xlu0 5
    %166 = vperm.xlu0 %165, %v43
    %v167 = vpop.permute.xlu0 %166
    %169 = vset.pattern.permute.xlu0 5
    %170 = vperm.xlu0 %169, %v44
    %v171 = vpop.permute.xlu0 %170
    %v173 = vmul.f32 %v72, %v163
    %v174 = vmul.f32 %v74, %v167
    %v175 = vmul.f32 %v160, %v171
    %v177 = vsel %vm94, %v98, 0.0
    %178 = vset.pattern.permute.xlu0 6
    %179 = vperm.xlu0 %178, %v42
    %v180 = vpop.permute.xlu0 %179
    %182 = vset.pattern.permute.xlu0 6
    %183 = vperm.xlu0 %182, %v43
    %v184 = vpop.permute.xlu0 %183
    %186 = vset.pattern.permute.xlu0 6
    %187 = vperm.xlu0 %186, %v44
    %v188 = vpop.permute.xlu0 %187
    %v190 = vmul.f32 %v97, %v180
    %v191 = vmul.f32 %v99, %v184
    %v192 = vmul.f32 %v177, %v188
    %v194 = vsel %vm119, %v123, 0.0
    %195 = vset.pattern.permute.xlu0 7
    %196 = vperm.xlu0 %195, %v42
    %v197 = vpop.permute.xlu0 %196
    %199 = vset.pattern.permute.xlu0 7
    %200 = vperm.xlu0 %199, %v43
    %v201 = vpop.permute.xlu0 %200
    %203 = vset.pattern.permute.xlu0 7
    %204 = vperm.xlu0 %203, %v44
    %v205 = vpop.permute.xlu0 %204
    %v207 = vmul.f32 %v122, %v197
    %v208 = vmul.f32 %v124, %v201
    %v209 = vmul.f32 %v194, %v205
    %210 = vset.pattern.permute.xlu0 8
    %211 = vperm.xlu0 %210, %v42
    %v212 = vpop.permute.xlu0 %211
    %214 = vset.pattern.permute.xlu0 8
    %215 = vperm.xlu0 %214, %v43
    %v216 = vpop.permute.xlu0 %215
    %218 = vset.pattern.permute.xlu0 8
    %219 = vperm.xlu0 %218, %v44
    %v220 = vpop.permute.xlu0 %219
    %v222 = vmul.f32 %v46, %v212
    %v223 = vmul.f32 %v47, %v216
    %v224 = vmul.f32 %v220, 0.0
    %228 = vrot.lane.b32.xlu0 %v91, 4
    %v229 = vpop.permute.xlu0 %228
    %230 = vrot.lane.b32.xlu0 %v92, 4
    %v231 = vpop.permute.xlu0 %230
    %232 = vrot.lane.b32.xlu0 %v93, 4
    %v233 = vpop.permute.xlu0 %232
    %240 = vrot.lane.b32.xlu0 %v116, 8
    %v241 = vpop.permute.xlu0 %240
    %242 = vrot.lane.b32.xlu0 %v117, 8
    %v243 = vpop.permute.xlu0 %242
    %244 = vrot.lane.b32.xlu0 %v118, 8
    %v245 = vpop.permute.xlu0 %244
    %252 = vrot.lane.b32.xlu0 %v141, 12
    %v253 = vpop.permute.xlu0 %252
    %254 = vrot.lane.b32.xlu0 %v142, 12
    %v255 = vpop.permute.xlu0 %254
    %256 = vrot.lane.b32.xlu0 %v143, 12
    %v257 = vpop.permute.xlu0 %256
    %264 = vrot.lane.b32.xlu0 %v156, 16
    %v265 = vpop.permute.xlu0 %264
    %266 = vrot.lane.b32.xlu0 %v157, 16
    %v267 = vpop.permute.xlu0 %266
    %268 = vrot.lane.b32.xlu0 %v158, 16
    %v269 = vpop.permute.xlu0 %268
    %276 = vrot.lane.b32.xlu0 %v173, 20
    %v277 = vpop.permute.xlu0 %276
    %278 = vrot.lane.b32.xlu0 %v174, 20
    %v279 = vpop.permute.xlu0 %278
    %280 = vrot.lane.b32.xlu0 %v175, 20
    %v281 = vpop.permute.xlu0 %280
    %288 = vrot.lane.b32.xlu0 %v190, 24
    %v289 = vpop.permute.xlu0 %288
    %290 = vrot.lane.b32.xlu0 %v191, 24
    %v291 = vpop.permute.xlu0 %290
    %292 = vrot.lane.b32.xlu0 %v192, 24
    %v293 = vpop.permute.xlu0 %292
    %300 = vrot.lane.b32.xlu0 %v207, 28
    %v301 = vpop.permute.xlu0 %300
    %302 = vrot.lane.b32.xlu0 %v208, 28
    %v303 = vpop.permute.xlu0 %302
    %304 = vrot.lane.b32.xlu0 %v209, 28
    %v305 = vpop.permute.xlu0 %304
    %312 = vrot.lane.b32.xlu0 %v222, 32
    %v313 = vpop.permute.xlu0 %312
    %314 = vrot.lane.b32.xlu0 %v223, 32
    %v315 = vpop.permute.xlu0 %314
    %316 = vrot.lane.b32.xlu0 %v224, 32
    %v317 = vpop.permute.xlu0 %316
    %vm321 = vcmask 31744
    %v322 = vsel %vm321, %v63, %v229
    %v323 = vsel %vm321, %v64, %v231
    %v324 = vsel %vm321, %v65, %v233
    %vm325 = vcmask 64512
    %v326 = vsel %vm325, %v322, %v241
    %v327 = vsel %vm325, %v323, %v243
    %v328 = vsel %vm325, %v324, %v245
    %vm329 = vcmask 97280
    %v330 = vsel %vm329, %v326, %v253
    %v331 = vsel %vm329, %v327, %v255
    %v332 = vsel %vm329, %v328, %v257
    %vm333 = vcmask 130048
    %v334 = vsel %vm333, %v330, %v265
    %v335 = vsel %vm333, %v331, %v267
    %v336 = vsel %vm333, %v332, %v269
    %vm337 = vcmask 162816
    %v338 = vsel %vm337, %v334, %v277
    %v339 = vsel %vm337, %v335, %v279
    %v340 = vsel %vm337, %v336, %v281
    %vm341 = vcmask 195584
    %v342 = vsel %vm341, %v338, %v289
    %v343 = vsel %vm341, %v339, %v291
    %v344 = vsel %vm341, %v340, %v293
    %vm345 = vcmask 228352
    %v346 = vsel %vm345, %v342, %v301
    %v347 = vsel %vm345, %v343, %v303
    %v348 = vsel %vm345, %v344, %v305
    %vm349 = vcmask 261120
    %v350 = vsel %vm349, %v346, %v313
    %v351 = vsel %vm349, %v347, %v315
    %v352 = vsel %vm349, %v348, %v317
    %v353 = vld [vmem:[%s2] sm:$0xff]
    %v354 = vld [vmem:[%s2 + $0x8] sm:$0xff]
    %v355 = vld [vmem:[%s2 + $0x10] sm:$0xff]
    %v356 = vld [vmem:[%s2 + $0x18] sm:$0xff]
    %v357 = vld [vmem:[%s2 + $0x20] sm:$0xf]
    %v358 = vld [vmem:[%s3] sm:$0x1]
    %v360 = vlaneseq
    %v361 = vshrl.u32 %v360, 7
    %v362 = vsub.s32 0, %v361
    %v363 = vrot.slane %v358, %v362
    %vm365 = vcmask 293888
    %v367 = vsel %vm365, %v350, 0
    %v370 = vsel %vm365, %v351, 0
    %v373 = vsel %vm365, %v352, 0
    %v376 = vsel %vm94, %v357, 0
    %378 = vmatprep.subr.mxu0 0.0
    %379 = vmatpush1.msra.mxu0 0.0
    %380 = vmatprep.subr.mxu0 0.0
    %381 = vmatpush1.msra.mxu0 0.0
    %382 = vmatprep.subr.mxu0 0.0
    %383 = vmatpush1.msra.mxu0 0.0
    %384 = vmatprep.subr.mxu0 0.0
    %385 = vmatpush1.msra.mxu0 0.0
    %386 = vmatprep.subr.mxu0 0.0
    %387 = vmatpush1.msra.mxu0 0.0
    %388 = vmatprep.subr.mxu0 0.0
    %389 = vmatpush1.msra.mxu0 0.0
    %390 = vmatprep.subr.mxu0 0.0
    %391 = vmatpush1.msra.mxu0 0.0
    %392 = vmatprep.subr.mxu0 0.0
    %393 = vmatpush1.msra.mxu0 0.0
    %394 = vmatprep.subr.mxu0 0.0
    %395 = vmatpush1.msra.mxu0 0.0
    %396 = vmatprep.subr.mxu0 0.0
    %397 = vmatpush1.msra.mxu0 0.0
    %398 = vmatprep.subr.mxu0 0.0
    %399 = vmatpush1.msra.mxu0 0.0
    %400 = vmatprep.subr.mxu0 0.0
    %401 = vmatpush1.msra.mxu0 %v376
    %402 = vmatprep.subr.mxu0 0.0
    %403 = vmatpush1.msra.mxu0 %v356
    %404 = vmatprep.subr.mxu0 0.0
    %405 = vmatpush1.msra.mxu0 %v355
    %406 = vmatprep.subr.mxu0 0.0
    %407 = vmatpush1.msra.mxu0 %v354
    %408 = vmatprep.subr.mxu0 0.0
    %409 = vmatpush1.msra.mxu0 %v353
    %410 = vmatprep.subr.mxu0 0.0
    %411 = vmatpush2.msra.mxu0 0.0
    %412 = vmatprep.subr.mxu0 0.0
    %413 = vmatpush2.msra.mxu0 0.0
    %414 = vmatprep.subr.mxu0 0.0
    %415 = vmatpush2.msra.mxu0 0.0
    %416 = vmatprep.subr.mxu0 0.0
    %417 = vmatpush2.msra.mxu0 0.0
    %418 = vmatprep.subr.mxu0 0.0
    %419 = vmatpush2.msra.mxu0 0.0
    %420 = vmatprep.subr.mxu0 0.0
    %421 = vmatpush2.msra.mxu0 0.0
    %422 = vmatprep.subr.mxu0 0.0
    %423 = vmatpush2.msra.mxu0 0.0
    %424 = vmatprep.subr.mxu0 0.0
    %425 = vmatpush2.msra.mxu0 0.0
    %426 = vmatprep.subr.mxu0 0.0
    %427 = vmatpush2.msra.mxu0 0.0
    %428 = vmatprep.subr.mxu0 0.0
    %429 = vmatpush2.msra.mxu0 0.0
    %430 = vmatprep.subr.mxu0 0.0
    %431 = vmatpush2.msra.mxu0 0.0
    %432 = vmatprep.subr.mxu0 0.0
    %433 = vmatpush2.msra.mxu0 0.0
    %434 = vmatprep.subr.mxu0 0.0
    %435 = vmatpush2.msra.mxu0 0.0
    %436 = vmatprep.subr.mxu0 0.0
    %437 = vmatpush2.msra.mxu0 0.0
    %438 = vmatprep.subr.mxu0 0.0
    %439 = vmatpush2.msra.mxu0 0.0
    %440 = vmatprep.subr.mxu0 0.0
    %441 = vmatpush2.msra.mxu0 0.0
    %442 = vmatprep.mubr.f32.mxu0 0.0
    %443 = vmatmul.mubr.f32.gmra.mxu0 %v367
    %v444 = vpop.f32.mrf.mxu0
    %v445 = vadd.f32 %v363, %v444
    %v446 = vpop.f32.mrf.mxu0
    %447 = vmatprep.mubr.f32.mxu0 0.0
    %448 = vmatmul.mubr.f32.gmra.mxu0 %v370
    %v449 = vpop.f32.mrf.mxu0
    %v450 = vadd.f32 %v363, %v449
    %v451 = vpop.f32.mrf.mxu0
    %452 = vmatprep.mubr.f32.mxu0 0.0
    %453 = vmatmul.mubr.f32.gmra.mxu0 %v373
    %v454 = vpop.f32.mrf.mxu0
    %v455 = vadd.f32 %v363, %v454
    %v456 = vpop.f32.mrf.mxu0
    %457 = vdwg.mxu0
    %v458 = vmax.f32 %v445, 0.0
    %v459 = vmax.f32 %v450, 0.0
    %v460 = vmax.f32 %v455, 0.0
    %v461 = vmul.f32 %v458, %v56
    %v462 = vmul.f32 %v459, %v61
    %v466 = vrot.slane %v458, 2
    %v467 = vrot.slane %v459, 2
    %v468 = vsel %vm69, %v466, %v467
    %v469 = vrot.slane %v460, 2
    %v470 = vsel %vm69, %v467, %v469
    %v474 = vsel %vm69, 0.0, %v466
    %v475 = vmul.f32 %v474, %v81
    %v476 = vmul.f32 %v468, %v85
    %v477 = vmul.f32 %v470, %v89
    %v478 = vrot.slane %v458, 4
    %v479 = vrot.slane %v459, 4
    %v480 = vsel %vm94, %v478, %v479
    %v481 = vrot.slane %v460, 4
    %v482 = vsel %vm94, %v479, %v481
    %v486 = vsel %vm94, 0.0, %v478
    %v487 = vmul.f32 %v486, %v106
    %v488 = vmul.f32 %v480, %v110
    %v489 = vmul.f32 %v482, %v114
    %v490 = vrot.slane %v458, 6
    %v491 = vrot.slane %v459, 6
    %v492 = vsel %vm119, %v490, %v491
    %v493 = vrot.slane %v460, 6
    %v494 = vsel %vm119, %v491, %v493
    %v498 = vsel %vm119, 0.0, %v490
    %v499 = vmul.f32 %v498, %v131
    %v500 = vmul.f32 %v492, %v135
    %v501 = vmul.f32 %v494, %v139
    %v502 = vmul.f32 %v458, %v146
    %v503 = vmul.f32 %v459, %v150
    %v504 = vmul.f32 %v460, %v154
    %v506 = vsel %vm69, %v469, 0.0
    %v507 = vmul.f32 %v468, %v163
    %v508 = vmul.f32 %v470, %v167
    %v509 = vmul.f32 %v506, %v171
    %v511 = vsel %vm94, %v481, 0.0
    %v512 = vmul.f32 %v480, %v180
    %v513 = vmul.f32 %v482, %v184
    %v514 = vmul.f32 %v511, %v188
    %v516 = vsel %vm119, %v493, 0.0
    %v517 = vmul.f32 %v492, %v197
    %v518 = vmul.f32 %v494, %v201
    %v519 = vmul.f32 %v516, %v205
    %v520 = vmul.f32 %v459, %v212
    %v521 = vmul.f32 %v460, %v216
    %525 = vrot.lane.b32.xlu0 %v475, 32
    %v526 = vpop.permute.xlu0 %525
    %527 = vrot.lane.b32.xlu0 %v476, 32
    %v528 = vpop.permute.xlu0 %527
    %529 = vrot.lane.b32.xlu0 %v477, 32
    %v530 = vpop.permute.xlu0 %529
    %537 = vrot.lane.b32.xlu0 %v487, 64
    %v538 = vpop.permute.xlu0 %537
    %539 = vrot.lane.b32.xlu0 %v488, 64
    %v540 = vpop.permute.xlu0 %539
    %541 = vrot.lane.b32.xlu0 %v489, 64
    %v542 = vpop.permute.xlu0 %541
    %549 = vrot.lane.b32.xlu0 %v499, 96
    %v550 = vpop.permute.xlu0 %549
    %551 = vrot.lane.b32.xlu0 %v500, 96
    %v552 = vpop.permute.xlu0 %551
    %553 = vrot.lane.b32.xlu0 %v501, 96
    %v554 = vpop.permute.xlu0 %553
    %561 = vrot.lane.b32.xlu0 %v507, 32
    %v562 = vpop.permute.xlu0 %561
    %563 = vrot.lane.b32.xlu0 %v508, 32
    %v564 = vpop.permute.xlu0 %563
    %565 = vrot.lane.b32.xlu0 %v509, 32
    %v566 = vpop.permute.xlu0 %565
    %573 = vrot.lane.b32.xlu0 %v512, 64
    %v574 = vpop.permute.xlu0 %573
    %575 = vrot.lane.b32.xlu0 %v513, 64
    %v576 = vpop.permute.xlu0 %575
    %577 = vrot.lane.b32.xlu0 %v514, 64
    %v578 = vpop.permute.xlu0 %577
    %585 = vrot.lane.b32.xlu0 %v517, 96
    %v586 = vpop.permute.xlu0 %585
    %587 = vrot.lane.b32.xlu0 %v518, 96
    %v588 = vpop.permute.xlu0 %587
    %589 = vrot.lane.b32.xlu0 %v519, 96
    %v590 = vpop.permute.xlu0 %589
    %v594 = vsel %vm349, %v63, %v526
    %v595 = vsel %vm349, %v461, %v528
    %v596 = vsel %vm349, %v462, %v530
    %vm597 = vcmask 523264
    %v598 = vsel %vm597, %v594, %v538
    %v599 = vsel %vm597, %v595, %v540
    %v600 = vsel %vm597, %v596, %v542
    %vm601 = vcmask 785408
    %v602 = vsel %vm601, %v598, %v550
    %v603 = vsel %vm601, %v599, %v552
    %v604 = vsel %vm601, %v600, %v554
    %v605 = vsel %vm349, %v502, %v562
    %v606 = vsel %vm349, %v503, %v564
    %v607 = vsel %vm349, %v504, %v566
    %v608 = vsel %vm597, %v605, %v574
    %v609 = vsel %vm597, %v606, %v576
    %v610 = vsel %vm597, %v607, %v578
    %v611 = vsel %vm601, %v608, %v586
    %v612 = vsel %vm601, %v609, %v588
    %v613 = vsel %vm601, %v610, %v590
    %v614 = vld [vmem:[%s4] sm:$0xff]
    %v615 = vld [vmem:[%s4 + $0x8] sm:$0xff]
    %v616 = vld [vmem:[%s4 + $0x10] sm:$0xff]
    %v617 = vld [vmem:[%s4 + $0x18] sm:$0xff]
    %v618 = vld [vmem:[%s4 + $0x20] sm:$0xff]
    %v619 = vld [vmem:[%s4 + $0x28] sm:$0xff]
    %v620 = vld [vmem:[%s4 + $0x30] sm:$0xff]
    %v621 = vld [vmem:[%s4 + $0x38] sm:$0xff]
    %v622 = vld [vmem:[%s4 + $0x40] sm:$0xff]
    %v623 = vld [vmem:[%s4 + $0x48] sm:$0xff]
    %v624 = vld [vmem:[%s4 + $0x50] sm:$0xff]
    %v625 = vld [vmem:[%s4 + $0x58] sm:$0xff]
    %v626 = vld [vmem:[%s4 + $0x60] sm:$0xff]
    %v627 = vld [vmem:[%s4 + $0x68] sm:$0xff]
    %v628 = vld [vmem:[%s4 + $0x70] sm:$0xff]
    %v629 = vld [vmem:[%s4 + $0x78] sm:$0xff]
    %v630 = vld [vmem:[%s4 + $0x80] sm:$0xff]
    %v631 = vld [vmem:[%s4 + $0x88] sm:$0xff]
    %v632 = vld [vmem:[%s4 + $0x90] sm:$0xff]
    %v633 = vld [vmem:[%s4 + $0x98] sm:$0xff]
    %v634 = vld [vmem:[%s4 + $0xa0] sm:$0xff]
    %v635 = vld [vmem:[%s4 + $0xa8] sm:$0xff]
    %v636 = vld [vmem:[%s4 + $0xb0] sm:$0xff]
    %v637 = vld [vmem:[%s4 + $0xb8] sm:$0xff]
    %v638 = vld [vmem:[%s4 + $0xc0] sm:$0xff]
    %v639 = vld [vmem:[%s4 + $0xc8] sm:$0xff]
    %v640 = vld [vmem:[%s4 + $0xd0] sm:$0xff]
    %v641 = vld [vmem:[%s4 + $0xd8] sm:$0xff]
    %v642 = vld [vmem:[%s4 + $0xe0] sm:$0xff]
    %v643 = vld [vmem:[%s4 + $0xe8] sm:$0xff]
    %v644 = vld [vmem:[%s4 + $0xf0] sm:$0xff]
    %v645 = vld [vmem:[%s4 + $0xf8] sm:$0xff]
    %v646 = vld [vmem:[%s4 + $0x100] sm:$0xff]
    %v647 = vld [vmem:[%s4 + $0x108] sm:$0xff]
    %v648 = vld [vmem:[%s4 + $0x110] sm:$0xff]
    %v649 = vld [vmem:[%s4 + $0x118] sm:$0xff]
    %v650 = vld [vmem:[%s5] sm:$0x1]
    %v652 = vlaneseq
    %v653 = vshrl.u32 %v652, 7
    %v654 = vsub.s32 0, %v653
    %v655 = vrot.slane %v650, %v654
    %v658 = vsel %vm349, %v520, 0
    %v661 = vsel %vm349, %v521, 0
    %v663 = vsel %vm349, %v224, 0
    %665 = vmatprep.subr.mxu0 0.0
    %666 = vmatpush1.msra.mxu0 %v629
    %667 = vmatprep.subr.mxu0 0.0
    %668 = vmatpush1.msra.mxu0 %v628
    %669 = vmatprep.subr.mxu0 0.0
    %670 = vmatpush1.msra.mxu0 %v627
    %671 = vmatprep.subr.mxu0 0.0
    %672 = vmatpush1.msra.mxu0 %v626
    %673 = vmatprep.subr.mxu0 0.0
    %674 = vmatpush1.msra.mxu0 %v625
    %675 = vmatprep.subr.mxu0 0.0
    %676 = vmatpush1.msra.mxu0 %v624
    %677 = vmatprep.subr.mxu0 0.0
    %678 = vmatpush1.msra.mxu0 %v623
    %679 = vmatprep.subr.mxu0 0.0
    %680 = vmatpush1.msra.mxu0 %v622
    %681 = vmatprep.subr.mxu0 0.0
    %682 = vmatpush1.msra.mxu0 %v621
    %683 = vmatprep.subr.mxu0 0.0
    %684 = vmatpush1.msra.mxu0 %v620
    %685 = vmatprep.subr.mxu0 0.0
    %686 = vmatpush1.msra.mxu0 %v619
    %687 = vmatprep.subr.mxu0 0.0
    %688 = vmatpush1.msra.mxu0 %v618
    %689 = vmatprep.subr.mxu0 0.0
    %690 = vmatpush1.msra.mxu0 %v617
    %691 = vmatprep.subr.mxu0 0.0
    %692 = vmatpush1.msra.mxu0 %v616
    %693 = vmatprep.subr.mxu0 0.0
    %694 = vmatpush1.msra.mxu0 %v615
    %695 = vmatprep.subr.mxu0 0.0
    %696 = vmatpush1.msra.mxu0 %v614
    %697 = vmatprep.subr.mxu0 0.0
    %698 = vmatpush2.msra.mxu0 %v645
    %699 = vmatprep.subr.mxu0 0.0
    %700 = vmatpush2.msra.mxu0 %v644
    %701 = vmatprep.subr.mxu0 0.0
    %702 = vmatpush2.msra.mxu0 %v643
    %703 = vmatprep.subr.mxu0 0.0
    %704 = vmatpush2.msra.mxu0 %v642
    %705 = vmatprep.subr.mxu0 0.0
    %706 = vmatpush2.msra.mxu0 %v641
    %707 = vmatprep.subr.mxu0 0.0
    %708 = vmatpush2.msra.mxu0 %v640
    %709 = vmatprep.subr.mxu0 0.0
    %710 = vmatpush2.msra.mxu0 %v639
    %711 = vmatprep.subr.mxu0 0.0
    %712 = vmatpush2.msra.mxu0 %v638
    %713 = vmatprep.subr.mxu0 0.0
    %714 = vmatpush2.msra.mxu0 %v637
    %715 = vmatprep.subr.mxu0 0.0
    %716 = vmatpush2.msra.mxu0 %v636
    %717 = vmatprep.subr.mxu0 0.0
    %718 = vmatpush2.msra.mxu0 %v635
    %719 = vmatprep.subr.mxu0 0.0
    %720 = vmatpush2.msra.mxu0 %v634
    %721 = vmatprep.subr.mxu0 0.0
    %722 = vmatpush2.msra.mxu0 %v633
    %723 = vmatprep.subr.mxu0 0.0
    %724 = vmatpush2.msra.mxu0 %v632
    %725 = vmatprep.subr.mxu0 0.0
    %726 = vmatpush2.msra.mxu0 %v631
    %727 = vmatprep.subr.mxu0 0.0
    %728 = vmatpush2.msra.mxu0 %v630
    %729 = vmatprep.mubr.f32.mxu0 %v611
    %730 = vmatmul.mubr.f32.gmra.mxu0 %v602
    %v731 = vpop.f32.mrf.mxu0
    %v732 = vadd.f32 %v655, %v731
    %v733 = vpop.f32.mrf.mxu0
    %734 = vmatprep.mubr.f32.mxu0 %v612
    %735 = vmatmul.mubr.f32.gmra.mxu0 %v603
    %v736 = vpop.f32.mrf.mxu0
    %v737 = vadd.f32 %v655, %v736
    %v738 = vpop.f32.mrf.mxu0
    %739 = vmatprep.mubr.f32.mxu0 %v613
    %740 = vmatmul.mubr.f32.gmra.mxu0 %v604
    %v741 = vpop.f32.mrf.mxu0
    %v742 = vadd.f32 %v655, %v741
    %v743 = vpop.f32.mrf.mxu0
    %744 = vdwg.mxu0
    %745 = vmatprep.subr.mxu0 0.0
    %746 = vmatpush1.msra.mxu0 0.0
    %747 = vmatprep.subr.mxu0 0.0
    %748 = vmatpush1.msra.mxu0 0.0
    %749 = vmatprep.subr.mxu0 0.0
    %750 = vmatpush1.msra.mxu0 0.0
    %751 = vmatprep.subr.mxu0 0.0
    %752 = vmatpush1.msra.mxu0 0.0
    %753 = vmatprep.subr.mxu0 0.0
    %754 = vmatpush1.msra.mxu0 0.0
    %755 = vmatprep.subr.mxu0 0.0
    %756 = vmatpush1.msra.mxu0 0.0
    %757 = vmatprep.subr.mxu0 0.0
    %758 = vmatpush1.msra.mxu0 0.0
    %759 = vmatprep.subr.mxu0 0.0
    %760 = vmatpush1.msra.mxu0 0.0
    %761 = vmatprep.subr.mxu0 0.0
    %762 = vmatpush1.msra.mxu0 0.0
    %763 = vmatprep.subr.mxu0 0.0
    %764 = vmatpush1.msra.mxu0 0.0
    %765 = vmatprep.subr.mxu0 0.0
    %766 = vmatpush1.msra.mxu0 0.0
    %767 = vmatprep.subr.mxu0 0.0
    %768 = vmatpush1.msra.mxu0 0.0
    %769 = vmatprep.subr.mxu0 0.0
    %770 = vmatpush1.msra.mxu0 %v649
    %771 = vmatprep.subr.mxu0 0.0
    %772 = vmatpush1.msra.mxu0 %v648
    %773 = vmatprep.subr.mxu0 0.0
    %774 = vmatpush1.msra.mxu0 %v647
    %775 = vmatprep.subr.mxu0 0.0
    %776 = vmatpush1.msra.mxu0 %v646
    %777 = vmatprep.subr.mxu0 0.0
    %778 = vmatpush2.msra.mxu0 0.0
    %779 = vmatprep.subr.mxu0 0.0
    %780 = vmatpush2.msra.mxu0 0.0
    %781 = vmatprep.subr.mxu0 0.0
    %782 = vmatpush2.msra.mxu0 0.0
    %783 = vmatprep.subr.mxu0 0.0
    %784 = vmatpush2.msra.mxu0 0.0
    %785 = vmatprep.subr.mxu0 0.0
    %786 = vmatpush2.msra.mxu0 0.0
    %787 = vmatprep.subr.mxu0 0.0
    %788 = vmatpush2.msra.mxu0 0.0
    %789 = vmatprep.subr.mxu0 0.0
    %790 = vmatpush2.msra.mxu0 0.0
    %791 = vmatprep.subr.mxu0 0.0
    %792 = vmatpush2.msra.mxu0 0.0
    %793 = vmatprep.subr.mxu0 0.0
    %794 = vmatpush2.msra.mxu0 0.0
    %795 = vmatprep.subr.mxu0 0.0
    %796 = vmatpush2.msra.mxu0 0.0
    %797 = vmatprep.subr.mxu0 0.0
    %798 = vmatpush2.msra.mxu0 0.0
    %799 = vmatprep.subr.mxu0 0.0
    %800 = vmatpush2.msra.mxu0 0.0
    %801 = vmatprep.subr.mxu0 0.0
    %802 = vmatpush2.msra.mxu0 0.0
    %803 = vmatprep.subr.mxu0 0.0
    %804 = vmatpush2.msra.mxu0 0.0
    %805 = vmatprep.subr.mxu0 0.0
    %806 = vmatpush2.msra.mxu0 0.0
    %807 = vmatprep.subr.mxu0 0.0
    %808 = vmatpush2.msra.mxu0 0.0
    %809 = vmatprep.mubr.f32.mxu0 0.0
    %810 = vmatmul.mubr.f32.gmra.mxu0 %v658
    %v811 = vpop.f32.mrf.mxu0
    %v812 = vadd.f32 %v732, %v811
    %v813 = vpop.f32.mrf.mxu0
    %814 = vmatprep.mubr.f32.mxu0 0.0
    %815 = vmatmul.mubr.f32.gmra.mxu0 %v661
    %v816 = vpop.f32.mrf.mxu0
    %v817 = vadd.f32 %v737, %v816
    %v818 = vpop.f32.mrf.mxu0
    %819 = vmatprep.mubr.f32.mxu0 0.0
    %820 = vmatmul.mubr.f32.gmra.mxu0 %v663
    %v821 = vpop.f32.mrf.mxu0
    %v822 = vadd.f32 %v742, %v821
    %v823 = vpop.f32.mrf.mxu0
    %824 = vdwg.mxu0
    %v825 = vmax.f32 %v812, 0.0
    %v826 = vmax.f32 %v817, 0.0
    %v827 = vmax.f32 %v822, 0.0
    %v828 = vmul.f32 %v825, %v56
    %v829 = vmul.f32 %v826, %v61
    %v833 = vrot.slane %v825, 2
    %v834 = vrot.slane %v826, 2
    %v835 = vsel %vm69, %v833, %v834
    %v836 = vrot.slane %v827, 2
    %v837 = vsel %vm69, %v834, %v836
    %v841 = vsel %vm69, 0.0, %v833
    %v842 = vmul.f32 %v841, %v81
    %v843 = vmul.f32 %v835, %v85
    %v844 = vmul.f32 %v837, %v89
    %v845 = vrot.slane %v825, 4
    %v846 = vrot.slane %v826, 4
    %v847 = vsel %vm94, %v845, %v846
    %v848 = vrot.slane %v827, 4
    %v849 = vsel %vm94, %v846, %v848
    %v853 = vsel %vm94, 0.0, %v845
    %v854 = vmul.f32 %v853, %v106
    %v855 = vmul.f32 %v847, %v110
    %v856 = vmul.f32 %v849, %v114
    %v857 = vrot.slane %v825, 6
    %v858 = vrot.slane %v826, 6
    %v859 = vsel %vm119, %v857, %v858
    %v860 = vrot.slane %v827, 6
    %v861 = vsel %vm119, %v858, %v860
    %v865 = vsel %vm119, 0.0, %v857
    %v866 = vmul.f32 %v865, %v131
    %v867 = vmul.f32 %v859, %v135
    %v868 = vmul.f32 %v861, %v139
    %v869 = vmul.f32 %v825, %v146
    %v870 = vmul.f32 %v826, %v150
    %v871 = vmul.f32 %v827, %v154
    %v873 = vsel %vm69, %v836, 0.0
    %v874 = vmul.f32 %v835, %v163
    %v875 = vmul.f32 %v837, %v167
    %v876 = vmul.f32 %v873, %v171
    %v878 = vsel %vm94, %v848, 0.0
    %v879 = vmul.f32 %v847, %v180
    %v880 = vmul.f32 %v849, %v184
    %v881 = vmul.f32 %v878, %v188
    %v883 = vsel %vm119, %v860, 0.0
    %v884 = vmul.f32 %v859, %v197
    %v885 = vmul.f32 %v861, %v201
    %v886 = vmul.f32 %v883, %v205
    %v887 = vmul.f32 %v826, %v212
    %v888 = vmul.f32 %v827, %v216
    %892 = vrot.lane.b32.xlu0 %v842, 32
    %v893 = vpop.permute.xlu0 %892
    %894 = vrot.lane.b32.xlu0 %v843, 32
    %v895 = vpop.permute.xlu0 %894
    %896 = vrot.lane.b32.xlu0 %v844, 32
    %v897 = vpop.permute.xlu0 %896
    %904 = vrot.lane.b32.xlu0 %v854, 64
    %v905 = vpop.permute.xlu0 %904
    %906 = vrot.lane.b32.xlu0 %v855, 64
    %v907 = vpop.permute.xlu0 %906
    %908 = vrot.lane.b32.xlu0 %v856, 64
    %v909 = vpop.permute.xlu0 %908
    %916 = vrot.lane.b32.xlu0 %v866, 96
    %v917 = vpop.permute.xlu0 %916
    %918 = vrot.lane.b32.xlu0 %v867, 96
    %v919 = vpop.permute.xlu0 %918
    %920 = vrot.lane.b32.xlu0 %v868, 96
    %v921 = vpop.permute.xlu0 %920
    %928 = vrot.lane.b32.xlu0 %v874, 32
    %v929 = vpop.permute.xlu0 %928
    %930 = vrot.lane.b32.xlu0 %v875, 32
    %v931 = vpop.permute.xlu0 %930
    %932 = vrot.lane.b32.xlu0 %v876, 32
    %v933 = vpop.permute.xlu0 %932
    %940 = vrot.lane.b32.xlu0 %v879, 64
    %v941 = vpop.permute.xlu0 %940
    %942 = vrot.lane.b32.xlu0 %v880, 64
    %v943 = vpop.permute.xlu0 %942
    %944 = vrot.lane.b32.xlu0 %v881, 64
    %v945 = vpop.permute.xlu0 %944
    %952 = vrot.lane.b32.xlu0 %v884, 96
    %v953 = vpop.permute.xlu0 %952
    %954 = vrot.lane.b32.xlu0 %v885, 96
    %v955 = vpop.permute.xlu0 %954
    %956 = vrot.lane.b32.xlu0 %v886, 96
    %v957 = vpop.permute.xlu0 %956
    %v961 = vsel %vm349, %v63, %v893
    %v962 = vsel %vm349, %v828, %v895
    %v963 = vsel %vm349, %v829, %v897
    %v964 = vsel %vm597, %v961, %v905
    %v965 = vsel %vm597, %v962, %v907
    %v966 = vsel %vm597, %v963, %v909
    %v967 = vsel %vm601, %v964, %v917
    %v968 = vsel %vm601, %v965, %v919
    %v969 = vsel %vm601, %v966, %v921
    %v970 = vsel %vm349, %v869, %v929
    %v971 = vsel %vm349, %v870, %v931
    %v972 = vsel %vm349, %v871, %v933
    %v973 = vsel %vm597, %v970, %v941
    %v974 = vsel %vm597, %v971, %v943
    %v975 = vsel %vm597, %v972, %v945
    %v976 = vsel %vm601, %v973, %v953
    %v977 = vsel %vm601, %v974, %v955
    %v978 = vsel %vm601, %v975, %v957
    %v979 = vld [vmem:[%s6] sm:$0xff]
    %v980 = vld [vmem:[%s6 + $0x8] sm:$0xff]
    %v981 = vld [vmem:[%s6 + $0x10] sm:$0xff]
    %v982 = vld [vmem:[%s6 + $0x18] sm:$0xff]
    %v983 = vld [vmem:[%s6 + $0x20] sm:$0xff]
    %v984 = vld [vmem:[%s6 + $0x28] sm:$0xff]
    %v985 = vld [vmem:[%s6 + $0x30] sm:$0xff]
    %v986 = vld [vmem:[%s6 + $0x38] sm:$0xff]
    %v987 = vld [vmem:[%s6 + $0x40] sm:$0xff]
    %v988 = vld [vmem:[%s6 + $0x48] sm:$0xff]
    %v989 = vld [vmem:[%s6 + $0x50] sm:$0xff]
    %v990 = vld [vmem:[%s6 + $0x58] sm:$0xff]
    %v991 = vld [vmem:[%s6 + $0x60] sm:$0xff]
    %v992 = vld [vmem:[%s6 + $0x68] sm:$0xff]
    %v993 = vld [vmem:[%s6 + $0x70] sm:$0xff]
    %v994 = vld [vmem:[%s6 + $0x78] sm:$0xff]
    %v995 = vld [vmem:[%s6 + $0x80] sm:$0xff]
    %v996 = vld [vmem:[%s6 + $0x88] sm:$0xff]
    %v997 = vld [vmem:[%s6 + $0x90] sm:$0xff]
    %v998 = vld [vmem:[%s6 + $0x98] sm:$0xff]
    %v999 = vld [vmem:[%s6 + $0xa0] sm:$0xff]
    %v1000 = vld [vmem:[%s6 + $0xa8] sm:$0xff]
    %v1001 = vld [vmem:[%s6 + $0xb0] sm:$0xff]
    %v1002 = vld [vmem:[%s6 + $0xb8] sm:$0xff]
    %v1003 = vld [vmem:[%s6 + $0xc0] sm:$0xff]
    %v1004 = vld [vmem:[%s6 + $0xc8] sm:$0xff]
    %v1005 = vld [vmem:[%s6 + $0xd0] sm:$0xff]
    %v1006 = vld [vmem:[%s6 + $0xd8] sm:$0xff]
    %v1007 = vld [vmem:[%s6 + $0xe0] sm:$0xff]
    %v1008 = vld [vmem:[%s6 + $0xe8] sm:$0xff]
    %v1009 = vld [vmem:[%s6 + $0xf0] sm:$0xff]
    %v1010 = vld [vmem:[%s6 + $0xf8] sm:$0xff]
    %v1011 = vld [vmem:[%s6 + $0x100] sm:$0xff]
    %v1012 = vld [vmem:[%s6 + $0x108] sm:$0xff]
    %v1013 = vld [vmem:[%s6 + $0x110] sm:$0xff]
    %v1014 = vld [vmem:[%s6 + $0x118] sm:$0xff]
    %v1015 = vld [vmem:[%s7] sm:$0x1]
    %v1017 = vlaneseq
    %v1018 = vshrl.u32 %v1017, 7
    %v1019 = vsub.s32 0, %v1018
    %v1020 = vrot.slane %v1015, %v1019
    %v1023 = vsel %vm349, %v887, 0
    %v1026 = vsel %vm349, %v888, 0
    %1028 = vmatprep.subr.mxu0 0.0
    %1029 = vmatpush1.msra.mxu0 %v994
    %1030 = vmatprep.subr.mxu0 0.0
    %1031 = vmatpush1.msra.mxu0 %v993
    %1032 = vmatprep.subr.mxu0 0.0
    %1033 = vmatpush1.msra.mxu0 %v992
    %1034 = vmatprep.subr.mxu0 0.0
    %1035 = vmatpush1.msra.mxu0 %v991
    %1036 = vmatprep.subr.mxu0 0.0
    %1037 = vmatpush1.msra.mxu0 %v990
    %1038 = vmatprep.subr.mxu0 0.0
    %1039 = vmatpush1.msra.mxu0 %v989
    %1040 = vmatprep.subr.mxu0 0.0
    %1041 = vmatpush1.msra.mxu0 %v988
    %1042 = vmatprep.subr.mxu0 0.0
    %1043 = vmatpush1.msra.mxu0 %v987
    %1044 = vmatprep.subr.mxu0 0.0
    %1045 = vmatpush1.msra.mxu0 %v986
    %1046 = vmatprep.subr.mxu0 0.0
    %1047 = vmatpush1.msra.mxu0 %v985
    %1048 = vmatprep.subr.mxu0 0.0
    %1049 = vmatpush1.msra.mxu0 %v984
    %1050 = vmatprep.subr.mxu0 0.0
    %1051 = vmatpush1.msra.mxu0 %v983
    %1052 = vmatprep.subr.mxu0 0.0
    %1053 = vmatpush1.msra.mxu0 %v982
    %1054 = vmatprep.subr.mxu0 0.0
    %1055 = vmatpush1.msra.mxu0 %v981
    %1056 = vmatprep.subr.mxu0 0.0
    %1057 = vmatpush1.msra.mxu0 %v980
    %1058 = vmatprep.subr.mxu0 0.0
    %1059 = vmatpush1.msra.mxu0 %v979
    %1060 = vmatprep.subr.mxu0 0.0
    %1061 = vmatpush2.msra.mxu0 %v1010
    %1062 = vmatprep.subr.mxu0 0.0
    %1063 = vmatpush2.msra.mxu0 %v1009
    %1064 = vmatprep.subr.mxu0 0.0
    %1065 = vmatpush2.msra.mxu0 %v1008
    %1066 = vmatprep.subr.mxu0 0.0
    %1067 = vmatpush2.msra.mxu0 %v1007
    %1068 = vmatprep.subr.mxu0 0.0
    %1069 = vmatpush2.msra.mxu0 %v1006
    %1070 = vmatprep.subr.mxu0 0.0
    %1071 = vmatpush2.msra.mxu0 %v1005
    %1072 = vmatprep.subr.mxu0 0.0
    %1073 = vmatpush2.msra.mxu0 %v1004
    %1074 = vmatprep.subr.mxu0 0.0
    %1075 = vmatpush2.msra.mxu0 %v1003
    %1076 = vmatprep.subr.mxu0 0.0
    %1077 = vmatpush2.msra.mxu0 %v1002
    %1078 = vmatprep.subr.mxu0 0.0
    %1079 = vmatpush2.msra.mxu0 %v1001
    %1080 = vmatprep.subr.mxu0 0.0
    %1081 = vmatpush2.msra.mxu0 %v1000
    %1082 = vmatprep.subr.mxu0 0.0
    %1083 = vmatpush2.msra.mxu0 %v999
    %1084 = vmatprep.subr.mxu0 0.0
    %1085 = vmatpush2.msra.mxu0 %v998
    %1086 = vmatprep.subr.mxu0 0.0
    %1087 = vmatpush2.msra.mxu0 %v997
    %1088 = vmatprep.subr.mxu0 0.0
    %1089 = vmatpush2.msra.mxu0 %v996
    %1090 = vmatprep.subr.mxu0 0.0
    %1091 = vmatpush2.msra.mxu0 %v995
    %1092 = vmatprep.mubr.f32.mxu0 %v976
    %1093 = vmatmul.mubr.f32.gmra.mxu0 %v967
    %v1094 = vpop.f32.mrf.mxu0
    %v1095 = vadd.f32 %v1020, %v1094
    %v1096 = vpop.f32.mrf.mxu0
    %1097 = vmatprep.mubr.f32.mxu0 %v977
    %1098 = vmatmul.mubr.f32.gmra.mxu0 %v968
    %v1099 = vpop.f32.mrf.mxu0
    %v1100 = vadd.f32 %v1020, %v1099
    %v1101 = vpop.f32.mrf.mxu0
    %1102 = vmatprep.mubr.f32.mxu0 %v978
    %1103 = vmatmul.mubr.f32.gmra.mxu0 %v969
    %v1104 = vpop.f32.mrf.mxu0
    %v1105 = vadd.f32 %v1020, %v1104
    %v1106 = vpop.f32.mrf.mxu0
    %1107 = vdwg.mxu0
    %1108 = vmatprep.subr.mxu0 0.0
    %1109 = vmatpush1.msra.mxu0 0.0
    %1110 = vmatprep.subr.mxu0 0.0
    %1111 = vmatpush1.msra.mxu0 0.0
    %1112 = vmatprep.subr.mxu0 0.0
    %1113 = vmatpush1.msra.mxu0 0.0
    %1114 = vmatprep.subr.mxu0 0.0
    %1115 = vmatpush1.msra.mxu0 0.0
    %1116 = vmatprep.subr.mxu0 0.0
    %1117 = vmatpush1.msra.mxu0 0.0
    %1118 = vmatprep.subr.mxu0 0.0
    %1119 = vmatpush1.msra.mxu0 0.0
    %1120 = vmatprep.subr.mxu0 0.0
    %1121 = vmatpush1.msra.mxu0 0.0
    %1122 = vmatprep.subr.mxu0 0.0
    %1123 = vmatpush1.msra.mxu0 0.0
    %1124 = vmatprep.subr.mxu0 0.0
    %1125 = vmatpush1.msra.mxu0 0.0
    %1126 = vmatprep.subr.mxu0 0.0
    %1127 = vmatpush1.msra.mxu0 0.0
    %1128 = vmatprep.subr.mxu0 0.0
    %1129 = vmatpush1.msra.mxu0 0.0
    %1130 = vmatprep.subr.mxu0 0.0
    %1131 = vmatpush1.msra.mxu0 0.0
    %1132 = vmatprep.subr.mxu0 0.0
    %1133 = vmatpush1.msra.mxu0 %v1014
    %1134 = vmatprep.subr.mxu0 0.0
    %1135 = vmatpush1.msra.mxu0 %v1013
    %1136 = vmatprep.subr.mxu0 0.0
    %1137 = vmatpush1.msra.mxu0 %v1012
    %1138 = vmatprep.subr.mxu0 0.0
    %1139 = vmatpush1.msra.mxu0 %v1011
    %1140 = vmatprep.subr.mxu0 0.0
    %1141 = vmatpush2.msra.mxu0 0.0
    %1142 = vmatprep.subr.mxu0 0.0
    %1143 = vmatpush2.msra.mxu0 0.0
    %1144 = vmatprep.subr.mxu0 0.0
    %1145 = vmatpush2.msra.mxu0 0.0
    %1146 = vmatprep.subr.mxu0 0.0
    %1147 = vmatpush2.msra.mxu0 0.0
    %1148 = vmatprep.subr.mxu0 0.0
    %1149 = vmatpush2.msra.mxu0 0.0
    %1150 = vmatprep.subr.mxu0 0.0
    %1151 = vmatpush2.msra.mxu0 0.0
    %1152 = vmatprep.subr.mxu0 0.0
    %1153 = vmatpush2.msra.mxu0 0.0
    %1154 = vmatprep.subr.mxu0 0.0
    %1155 = vmatpush2.msra.mxu0 0.0
    %1156 = vmatprep.subr.mxu0 0.0
    %1157 = vmatpush2.msra.mxu0 0.0
    %1158 = vmatprep.subr.mxu0 0.0
    %1159 = vmatpush2.msra.mxu0 0.0
    %1160 = vmatprep.subr.mxu0 0.0
    %1161 = vmatpush2.msra.mxu0 0.0
    %1162 = vmatprep.subr.mxu0 0.0
    %1163 = vmatpush2.msra.mxu0 0.0
    %1164 = vmatprep.subr.mxu0 0.0
    %1165 = vmatpush2.msra.mxu0 0.0
    %1166 = vmatprep.subr.mxu0 0.0
    %1167 = vmatpush2.msra.mxu0 0.0
    %1168 = vmatprep.subr.mxu0 0.0
    %1169 = vmatpush2.msra.mxu0 0.0
    %1170 = vmatprep.subr.mxu0 0.0
    %1171 = vmatpush2.msra.mxu0 0.0
    %1172 = vmatprep.mubr.f32.mxu0 0.0
    %1173 = vmatmul.mubr.f32.gmra.mxu0 %v1023
    %v1174 = vpop.f32.mrf.mxu0
    %v1175 = vadd.f32 %v1095, %v1174
    %v1176 = vpop.f32.mrf.mxu0
    %1177 = vmatprep.mubr.f32.mxu0 0.0
    %1178 = vmatmul.mubr.f32.gmra.mxu0 %v1026
    %v1179 = vpop.f32.mrf.mxu0
    %v1180 = vadd.f32 %v1100, %v1179
    %v1181 = vpop.f32.mrf.mxu0
    %1182 = vmatprep.mubr.f32.mxu0 0.0
    %1183 = vmatmul.mubr.f32.gmra.mxu0 %v663
    %v1184 = vpop.f32.mrf.mxu0
    %v1185 = vadd.f32 %v1105, %v1184
    %v1186 = vpop.f32.mrf.mxu0
    %1187 = vdwg.mxu0
    %v1188 = vmax.f32 %v1175, 0.0
    %v1189 = vmax.f32 %v1180, 0.0
    %v1190 = vmax.f32 %v1185, 0.0
    %v1192 = vrot.slane %v1188, 2
    %1193 = vrot.lane.b32.xlu0 %v1192, 32
    %v1194 = vpop.permute.xlu0 %1193
    %v1196 = vrot.slane %v1188, 4
    %1197 = vrot.lane.b32.xlu0 %v1196, 64
    %v1198 = vpop.permute.xlu0 %1197
    %v1200 = vrot.slane %v1188, 6
    %1201 = vrot.lane.b32.xlu0 %v1200, 96
    %v1202 = vpop.permute.xlu0 %1201
    %v1205 = vrot.slane %v1189, 2
    %1206 = vrot.lane.b32.xlu0 %v1205, 32
    %v1207 = vpop.permute.xlu0 %1206
    %v1209 = vrot.slane %v1189, 4
    %1210 = vrot.lane.b32.xlu0 %v1209, 64
    %v1211 = vpop.permute.xlu0 %1210
    %v1213 = vrot.slane %v1189, 6
    %1214 = vrot.lane.b32.xlu0 %v1213, 96
    %v1215 = vpop.permute.xlu0 %1214
    %v1218 = vrot.slane %v1190, 2
    %1219 = vrot.lane.b32.xlu0 %v1218, 32
    %v1220 = vpop.permute.xlu0 %1219
    %v1222 = vrot.slane %v1190, 4
    %1223 = vrot.lane.b32.xlu0 %v1222, 64
    %v1224 = vpop.permute.xlu0 %1223
    %v1226 = vrot.slane %v1190, 6
    %1227 = vrot.lane.b32.xlu0 %v1226, 96
    %v1228 = vpop.permute.xlu0 %1227
    %v1230 = vsel %vm349, %v1188, %v1194
    %v1231 = vsel %vm597, %v1230, %v1198
    %v1232 = vsel %vm601, %v1231, %v1202
    %v1233 = vsel %vm349, %v1189, %v1207
    %v1234 = vsel %vm597, %v1233, %v1211
    %v1235 = vsel %vm601, %v1234, %v1215
    %v1236 = vsel %vm349, %v1190, %v1220
    %v1237 = vsel %vm597, %v1236, %v1224
    %v1238 = vsel %vm601, %v1237, %v1228
    %v1239 = vld [vmem:[%s8] sm:$0xff]
    %v1240 = vld [vmem:[%s8 + $0x8] sm:$0xff]
    %v1241 = vld [vmem:[%s8 + $0x10] sm:$0xff]
    %v1242 = vld [vmem:[%s8 + $0x18] sm:$0xff]
    %v1243 = vld [vmem:[%s8 + $0x20] sm:$0xff]
    %v1244 = vld [vmem:[%s8 + $0x28] sm:$0xff]
    %v1245 = vld [vmem:[%s8 + $0x30] sm:$0xff]
    %v1246 = vld [vmem:[%s8 + $0x38] sm:$0xff]
    %v1247 = vld [vmem:[%s8 + $0x40] sm:$0xff]
    %v1248 = vld [vmem:[%s8 + $0x48] sm:$0xff]
    %v1249 = vld [vmem:[%s8 + $0x50] sm:$0xff]
    %v1250 = vld [vmem:[%s8 + $0x58] sm:$0xff]
    %v1251 = vld [vmem:[%s8 + $0x60] sm:$0xff]
    %v1252 = vld [vmem:[%s8 + $0x68] sm:$0xff]
    %v1253 = vld [vmem:[%s8 + $0x70] sm:$0xff]
    %v1254 = vld [vmem:[%s8 + $0x78] sm:$0xff]
    %v1255 = vld [vmem:[%s8 + $0x80] sm:$0xff]
    %v1256 = vld [vmem:[%s8 + $0x88] sm:$0xff]
    %v1257 = vld [vmem:[%s8 + $0x90] sm:$0xff]
    %v1258 = vld [vmem:[%s8 + $0x98] sm:$0xff]
    %v1259 = vld [vmem:[%s8 + $0xa0] sm:$0xff]
    %v1260 = vld [vmem:[%s8 + $0xa8] sm:$0xff]
    %v1261 = vld [vmem:[%s8 + $0xb0] sm:$0xff]
    %v1262 = vld [vmem:[%s8 + $0xb8] sm:$0xff]
    %v1263 = vld [vmem:[%s8 + $0xc0] sm:$0xff]
    %v1264 = vld [vmem:[%s8 + $0xc8] sm:$0xff]
    %v1265 = vld [vmem:[%s8 + $0xd0] sm:$0xff]
    %v1266 = vld [vmem:[%s8 + $0xd8] sm:$0xff]
    %v1267 = vld [vmem:[%s8 + $0xe0] sm:$0xff]
    %v1268 = vld [vmem:[%s8 + $0xe8] sm:$0xff]
    %v1269 = vld [vmem:[%s8 + $0xf0] sm:$0xff]
    %v1270 = vld [vmem:[%s8 + $0xf8] sm:$0xff]
    %v1271 = vld [vmem:[%s8 + $0x100] sm:$0xff]
    %v1272 = vld [vmem:[%s8 + $0x108] sm:$0xff]
    %v1273 = vld [vmem:[%s8 + $0x110] sm:$0xff]
    %v1274 = vld [vmem:[%s8 + $0x118] sm:$0xff]
    %v1275 = vld [vmem:[%s8 + $0x120] sm:$0xff]
    %v1276 = vld [vmem:[%s8 + $0x128] sm:$0xff]
    %v1277 = vld [vmem:[%s8 + $0x130] sm:$0xff]
    %v1278 = vld [vmem:[%s8 + $0x138] sm:$0xff]
    %v1279 = vld [vmem:[%s8 + $0x140] sm:$0xff]
    %v1280 = vld [vmem:[%s8 + $0x148] sm:$0xff]
    %v1281 = vld [vmem:[%s8 + $0x150] sm:$0xff]
    %v1282 = vld [vmem:[%s8 + $0x158] sm:$0xff]
    %v1283 = vld [vmem:[%s8 + $0x160] sm:$0xff]
    %v1284 = vld [vmem:[%s8 + $0x168] sm:$0xff]
    %v1285 = vld [vmem:[%s8 + $0x170] sm:$0xff]
    %v1286 = vld [vmem:[%s8 + $0x178] sm:$0xff]
    %v1287 = vld [vmem:[%s9] sm:$0x1]
    %v1289 = vlaneseq
    %v1290 = vshrl.u32 %v1289, 7
    %v1291 = vsub.s32 0, %v1290
    %v1292 = vrot.slane %v1287, %v1291
    %1294 = vmatprep.subr.mxu0 0.0
    %1295 = vmatpush1.msra.mxu0 %v1254
    %1296 = vmatprep.subr.mxu0 0.0
    %1297 = vmatpush1.msra.mxu0 %v1253
    %1298 = vmatprep.subr.mxu0 0.0
    %1299 = vmatpush1.msra.mxu0 %v1252
    %1300 = vmatprep.subr.mxu0 0.0
    %1301 = vmatpush1.msra.mxu0 %v1251
    %1302 = vmatprep.subr.mxu0 0.0
    %1303 = vmatpush1.msra.mxu0 %v1250
    %1304 = vmatprep.subr.mxu0 0.0
    %1305 = vmatpush1.msra.mxu0 %v1249
    %1306 = vmatprep.subr.mxu0 0.0
    %1307 = vmatpush1.msra.mxu0 %v1248
    %1308 = vmatprep.subr.mxu0 0.0
    %1309 = vmatpush1.msra.mxu0 %v1247
    %1310 = vmatprep.subr.mxu0 0.0
    %1311 = vmatpush1.msra.mxu0 %v1246
    %1312 = vmatprep.subr.mxu0 0.0
    %1313 = vmatpush1.msra.mxu0 %v1245
    %1314 = vmatprep.subr.mxu0 0.0
    %1315 = vmatpush1.msra.mxu0 %v1244
    %1316 = vmatprep.subr.mxu0 0.0
    %1317 = vmatpush1.msra.mxu0 %v1243
    %1318 = vmatprep.subr.mxu0 0.0
    %1319 = vmatpush1.msra.mxu0 %v1242
    %1320 = vmatprep.subr.mxu0 0.0
    %1321 = vmatpush1.msra.mxu0 %v1241
    %1322 = vmatprep.subr.mxu0 0.0
    %1323 = vmatpush1.msra.mxu0 %v1240
    %1324 = vmatprep.subr.mxu0 0.0
    %1325 = vmatpush1.msra.mxu0 %v1239
    %1326 = vmatprep.subr.mxu0 0.0
    %1327 = vmatpush2.msra.mxu0 %v1270
    %1328 = vmatprep.subr.mxu0 0.0
    %1329 = vmatpush2.msra.mxu0 %v1269
    %1330 = vmatprep.subr.mxu0 0.0
    %1331 = vmatpush2.msra.mxu0 %v1268
    %1332 = vmatprep.subr.mxu0 0.0
    %1333 = vmatpush2.msra.mxu0 %v1267
    %1334 = vmatprep.subr.mxu0 0.0
    %1335 = vmatpush2.msra.mxu0 %v1266
    %1336 = vmatprep.subr.mxu0 0.0
    %1337 = vmatpush2.msra.mxu0 %v1265
    %1338 = vmatprep.subr.mxu0 0.0
    %1339 = vmatpush2.msra.mxu0 %v1264
    %1340 = vmatprep.subr.mxu0 0.0
    %1341 = vmatpush2.msra.mxu0 %v1263
    %1342 = vmatprep.subr.mxu0 0.0
    %1343 = vmatpush2.msra.mxu0 %v1262
    %1344 = vmatprep.subr.mxu0 0.0
    %1345 = vmatpush2.msra.mxu0 %v1261
    %1346 = vmatprep.subr.mxu0 0.0
    %1347 = vmatpush2.msra.mxu0 %v1260
    %1348 = vmatprep.subr.mxu0 0.0
    %1349 = vmatpush2.msra.mxu0 %v1259
    %1350 = vmatprep.subr.mxu0 0.0
    %1351 = vmatpush2.msra.mxu0 %v1258
    %1352 = vmatprep.subr.mxu0 0.0
    %1353 = vmatpush2.msra.mxu0 %v1257
    %1354 = vmatprep.subr.mxu0 0.0
    %1355 = vmatpush2.msra.mxu0 %v1256
    %1356 = vmatprep.subr.mxu0 0.0
    %1357 = vmatpush2.msra.mxu0 %v1255
    %1358 = vmatprep.mubr.f32.mxu0 %v1235
    %1359 = vmatmul.mubr.f32.gmra.mxu0 %v1232
    %v1360 = vpop.f32.mrf.mxu0
    %v1361 = vadd.f32 %v1292, %v1360
    %v1362 = vpop.f32.mrf.mxu0
    %1363 = vdwg.mxu0
    %1364 = vmatprep.subr.mxu0 0.0
    %1365 = vmatpush1.msra.mxu0 %v1286
    %1366 = vmatprep.subr.mxu0 0.0
    %1367 = vmatpush1.msra.mxu0 %v1285
    %1368 = vmatprep.subr.mxu0 0.0
    %1369 = vmatpush1.msra.mxu0 %v1284
    %1370 = vmatprep.subr.mxu0 0.0
    %1371 = vmatpush1.msra.mxu0 %v1283
    %1372 = vmatprep.subr.mxu0 0.0
    %1373 = vmatpush1.msra.mxu0 %v1282
    %1374 = vmatprep.subr.mxu0 0.0
    %1375 = vmatpush1.msra.mxu0 %v1281
    %1376 = vmatprep.subr.mxu0 0.0
    %1377 = vmatpush1.msra.mxu0 %v1280
    %1378 = vmatprep.subr.mxu0 0.0
    %1379 = vmatpush1.msra.mxu0 %v1279
    %1380 = vmatprep.subr.mxu0 0.0
    %1381 = vmatpush1.msra.mxu0 %v1278
    %1382 = vmatprep.subr.mxu0 0.0
    %1383 = vmatpush1.msra.mxu0 %v1277
    %1384 = vmatprep.subr.mxu0 0.0
    %1385 = vmatpush1.msra.mxu0 %v1276
    %1386 = vmatprep.subr.mxu0 0.0
    %1387 = vmatpush1.msra.mxu0 %v1275
    %1388 = vmatprep.subr.mxu0 0.0
    %1389 = vmatpush1.msra.mxu0 %v1274
    %1390 = vmatprep.subr.mxu0 0.0
    %1391 = vmatpush1.msra.mxu0 %v1273
    %1392 = vmatprep.subr.mxu0 0.0
    %1393 = vmatpush1.msra.mxu0 %v1272
    %1394 = vmatprep.subr.mxu0 0.0
    %1395 = vmatpush1.msra.mxu0 %v1271
    %1396 = vmatprep.subr.mxu0 0.0
    %1397 = vmatpush2.msra.mxu0 0.0
    %1398 = vmatprep.subr.mxu0 0.0
    %1399 = vmatpush2.msra.mxu0 0.0
    %1400 = vmatprep.subr.mxu0 0.0
    %1401 = vmatpush2.msra.mxu0 0.0
    %1402 = vmatprep.subr.mxu0 0.0
    %1403 = vmatpush2.msra.mxu0 0.0
    %1404 = vmatprep.subr.mxu0 0.0
    %1405 = vmatpush2.msra.mxu0 0.0
    %1406 = vmatprep.subr.mxu0 0.0
    %1407 = vmatpush2.msra.mxu0 0.0
    %1408 = vmatprep.subr.mxu0 0.0
    %1409 = vmatpush2.msra.mxu0 0.0
    %1410 = vmatprep.subr.mxu0 0.0
    %1411 = vmatpush2.msra.mxu0 0.0
    %1412 = vmatprep.subr.mxu0 0.0
    %1413 = vmatpush2.msra.mxu0 0.0
    %1414 = vmatprep.subr.mxu0 0.0
    %1415 = vmatpush2.msra.mxu0 0.0
    %1416 = vmatprep.subr.mxu0 0.0
    %1417 = vmatpush2.msra.mxu0 0.0
    %1418 = vmatprep.subr.mxu0 0.0
    %1419 = vmatpush2.msra.mxu0 0.0
    %1420 = vmatprep.subr.mxu0 0.0
    %1421 = vmatpush2.msra.mxu0 0.0
    %1422 = vmatprep.subr.mxu0 0.0
    %1423 = vmatpush2.msra.mxu0 0.0
    %1424 = vmatprep.subr.mxu0 0.0
    %1425 = vmatpush2.msra.mxu0 0.0
    %1426 = vmatprep.subr.mxu0 0.0
    %1427 = vmatpush2.msra.mxu0 0.0
    %1428 = vmatprep.mubr.f32.mxu0 0.0
    %1429 = vmatmul.mubr.f32.gmra.mxu0 %v1238
    %v1430 = vpop.f32.mrf.mxu0
    %v1431 = vadd.f32 %v1361, %v1430
    %v1432 = vpop.f32.mrf.mxu0
    %1433 = vdwg.mxu0
    %v1434 = vmax.f32 %v1431, 0.0
    %v1435 = vld [vmem:[%s10] sm:$0xff]
    %v1436 = vld [vmem:[%s10 + $0x8] sm:$0xff]
    %v1437 = vld [vmem:[%s10 + $0x10] sm:$0xff]
    %v1438 = vld [vmem:[%s10 + $0x18] sm:$0xff]
    %v1439 = vld [vmem:[%s10 + $0x20] sm:$0xff]
    %v1440 = vld [vmem:[%s10 + $0x28] sm:$0xff]
    %v1441 = vld [vmem:[%s10 + $0x30] sm:$0xff]
    %v1442 = vld [vmem:[%s10 + $0x38] sm:$0xff]
    %v1443 = vld [vmem:[%s10 + $0x40] sm:$0xff]
    %v1444 = vld [vmem:[%s10 + $0x48] sm:$0xff]
    %v1445 = vld [vmem:[%s10 + $0x50] sm:$0xff]
    %v1446 = vld [vmem:[%s10 + $0x58] sm:$0xff]
    %v1447 = vld [vmem:[%s10 + $0x60] sm:$0xff]
    %v1448 = vld [vmem:[%s10 + $0x68] sm:$0xff]
    %v1449 = vld [vmem:[%s10 + $0x70] sm:$0xff]
    %v1450 = vld [vmem:[%s10 + $0x78] sm:$0xff]
    %v1451 = vld [vmem:[%s11] sm:$0x1]
    %v1453 = vlaneseq
    %v1454 = vshrl.u32 %v1453, 7
    %v1455 = vsub.s32 0, %v1454
    %v1456 = vrot.slane %v1451, %v1455
    %1458 = vmatprep.subr.mxu0 0.0
    %1459 = vmatpush1.msra.mxu0 %v1450
    %1460 = vmatprep.subr.mxu0 0.0
    %1461 = vmatpush1.msra.mxu0 %v1449
    %1462 = vmatprep.subr.mxu0 0.0
    %1463 = vmatpush1.msra.mxu0 %v1448
    %1464 = vmatprep.subr.mxu0 0.0
    %1465 = vmatpush1.msra.mxu0 %v1447
    %1466 = vmatprep.subr.mxu0 0.0
    %1467 = vmatpush1.msra.mxu0 %v1446
    %1468 = vmatprep.subr.mxu0 0.0
    %1469 = vmatpush1.msra.mxu0 %v1445
    %1470 = vmatprep.subr.mxu0 0.0
    %1471 = vmatpush1.msra.mxu0 %v1444
    %1472 = vmatprep.subr.mxu0 0.0
    %1473 = vmatpush1.msra.mxu0 %v1443
    %1474 = vmatprep.subr.mxu0 0.0
    %1475 = vmatpush1.msra.mxu0 %v1442
    %1476 = vmatprep.subr.mxu0 0.0
    %1477 = vmatpush1.msra.mxu0 %v1441
    %1478 = vmatprep.subr.mxu0 0.0
    %1479 = vmatpush1.msra.mxu0 %v1440
    %1480 = vmatprep.subr.mxu0 0.0
    %1481 = vmatpush1.msra.mxu0 %v1439
    %1482 = vmatprep.subr.mxu0 0.0
    %1483 = vmatpush1.msra.mxu0 %v1438
    %1484 = vmatprep.subr.mxu0 0.0
    %1485 = vmatpush1.msra.mxu0 %v1437
    %1486 = vmatprep.subr.mxu0 0.0
    %1487 = vmatpush1.msra.mxu0 %v1436
    %1488 = vmatprep.subr.mxu0 0.0
    %1489 = vmatpush1.msra.mxu0 %v1435
    %1490 = vmatprep.subr.mxu0 0.0
    %1491 = vmatpush2.msra.mxu0 0.0
    %1492 = vmatprep.subr.mxu0 0.0
    %1493 = vmatpush2.msra.mxu0 0.0
    %1494 = vmatprep.subr.mxu0 0.0
    %1495 = vmatpush2.msra.mxu0 0.0
    %1496 = vmatprep.subr.mxu0 0.0
    %1497 = vmatpush2.msra.mxu0 0.0
    %1498 = vmatprep.subr.mxu0 0.0
    %1499 = vmatpush2.msra.mxu0 0.0
    %1500 = vmatprep.subr.mxu0 0.0
    %1501 = vmatpush2.msra.mxu0 0.0
    %1502 = vmatprep.subr.mxu0 0.0
    %1503 = vmatpush2.msra.mxu0 0.0
    %1504 = vmatprep.subr.mxu0 0.0
    %1505 = vmatpush2.msra.mxu0 0.0
    %1506 = vmatprep.subr.mxu0 0.0
    %1507 = vmatpush2.msra.mxu0 0.0
    %1508 = vmatprep.subr.mxu0 0.0
    %1509 = vmatpush2.msra.mxu0 0.0
    %1510 = vmatprep.subr.mxu0 0.0
    %1511 = vmatpush2.msra.mxu0 0.0
    %1512 = vmatprep.subr.mxu0 0.0
    %1513 = vmatpush2.msra.mxu0 0.0
    %1514 = vmatprep.subr.mxu0 0.0
    %1515 = vmatpush2.msra.mxu0 0.0
    %1516 = vmatprep.subr.mxu0 0.0
    %1517 = vmatpush2.msra.mxu0 0.0
    %1518 = vmatprep.subr.mxu0 0.0
    %1519 = vmatpush2.msra.mxu0 0.0
    %1520 = vmatprep.subr.mxu0 0.0
    %1521 = vmatpush2.msra.mxu0 0.0
    %1522 = vmatprep.mubr.f32.mxu0 0.0
    %1523 = vmatmul.mubr.f32.gmra.mxu0 %v1434
    %v1524 = vpop.f32.mrf.mxu0
    %v1525 = vadd.f32 %v1456, %v1524
    %v1526 = vpop.f32.mrf.mxu0
    %1527 = vdwg.mxu0
    %1528 = vst [vmem:[#allocation2] sm:$0x3] %v1525
    // Predicated region
    $region50: #{tpu_custom_call.1} parent=1 // pred_check
      _
    $region51: #{tpu_custom_call.1} parent=1 // pred_check_branch
      %1530 = sbr.rel (0) target = $region53
    $region52: #{tpu_custom_call.1} parent=1 // pred_region
      %s1532 = ssub.s32 32, 32
      %1533 = vsyncadd [#allocation3], %s1532
      %s1535 = sshll.u32 [#allocation2], 4
      %s1536 = int_to_ptr.vmem [resolvable:$true] %s1535
      %1538 = dma.vmem_to_hbm [thread:$0]  %s1536, 32, %s12, [#allocation3]
    $region53: #{tpu_custom_call.1} parent=1 // pred_fallthru
      _
    // Predicated region
    $region54: #{tpu_custom_call.1} parent=1 // pred_check
      _
    $region55: #{tpu_custom_call.1} parent=1 // pred_check_branch
      %1540 = sbr.rel (0) target = $region57
    $region56: #{tpu_custom_call.1} parent=1 // pred_region
      %1541 = dma.done [#allocation3], 32
    $region57: #{tpu_custom_call.1} parent=1 // pred_fallthru
      _
    %1542 = vsyncpa [#allocation3], 1

</llo_original>
